<compile_context>
chip_gen: v5e
topology: v5e:2x2
jax: 0.10.0
libtpu: 0.0.40
codegen_flags: <defaults>
</compile_context>

<pallas_src>
import jax
import jax.numpy as jnp
from jax.experimental import pallas as pl
from jax.experimental.pallas import tpu as pltpu

# --- logical dimensions implied by the module (task == 'regression') ---
IN_FEATURES = 32 * 3 * 10   # 960
H1, H2, OUT = 500, 50, 10
# --- lane-padded dimensions used by the kernel ---
H1P, H2P, OUTP = 512, 128, 128


def _round_up(x, m):
    return ((x + m - 1) // m) * m


def _num_tensorcores():
    """TensorCores per chip (2 on v7x, 1 on v5e/v6e). Safe fallback to 1."""
    try:
        return max(1, int(getattr(jax.devices()[0], "num_cores", 1)))
    except Exception:
        return 1


def mlp_kernel(x_ref, w1_ref, b1_ref, w2_ref, b2_ref, w3_ref, b3_ref, o_ref):
    """One (TM, 960) batch tile through the fused 3-layer MLP."""
    # In-kernel f32 -> bf16 cast of the activations (x arrives as f32).
    x = x_ref[...].astype(jnp.bfloat16)                               # (TM, 960)

    # Layer 1: value-held f32 intermediate (no VMEM scratch; MXU tiling handled by Mosaic).
    h1 = jnp.dot(x, w1_ref[...], preferred_element_type=jnp.float32)  # (TM, 512)
    h1 = jnp.maximum(h1 + b1_ref[...], 0.0)

    # Layer 2.
    h2 = jnp.dot(h1.astype(jnp.bfloat16), w2_ref[...],
                 preferred_element_type=jnp.float32)                  # (TM, 128)
    h2 = jnp.maximum(h2 + b2_ref[...], 0.0)

    # Layer 3: bf16 output, lane-dense (128-wide padded) unmasked store.
    o = jnp.dot(h2.astype(jnp.bfloat16), w3_ref[...],
                preferred_element_type=jnp.float32) + b3_ref[...]     # (TM, 128) f32
    o_ref[...] = o.astype(o_ref.dtype)


def output_layer_forward(x_nchw, kparams, *, tm=1024):
    """x_nchw: (B, 32, 3, 10) float32. kparams: output of prepare_kernel_params.
    Returns (B, 10) float32."""
    w1, b1, w2, b2, w3, b3 = kparams
    B = x_nchw.shape[0]
    # nn.Flatten on NCHW == row-major reshape. Keep f32 here; cast happens in-kernel.
    x = x_nchw.reshape(B, -1)                                         # (B, 960) f32

    # Batch tiling: TM multiple of 16; pad B up to a multiple of TM, slice back at the end.
    ncores = _num_tensorcores()
    TM = min(tm, _round_up(B, 16))
    if ncores > 1 and _round_up(B, 16) >= ncores * 16:
        # v7x: guarantee >= ncores grid steps so both TensorCores get work.
        TM = min(TM, _round_up(pl.cdiv(B, ncores), 16))
    Bp = _round_up(B, TM)
    if Bp != B:
        x = jnp.pad(x, ((0, Bp - B), (0, 0)))
    nblk = Bp // TM

    cost = pl.CostEstimate(
        flops=2 * Bp * (IN_FEATURES * H1P + H1P * H2P + H2P * OUTP),
        transcendentals=0,
        bytes_accessed=(x.size * 4                               # f32 activations in
                        + (w1.size + w2.size + w3.size) * 2      # bf16 weights
                        + (b1.size + b2.size + b3.size) * 4      # f32 biases
                        + Bp * OUTP * 2),                        # bf16 output
    )

    const = lambda i: (0, 0)  # weights/biases: same block every step -> stay VMEM-resident
    out = pl.pallas_call(
        mlp_kernel,
        out_shape=jax.ShapeDtypeStruct((Bp, OUTP), jnp.bfloat16),
        grid_spec=pltpu.PrefetchScalarGridSpec(
            num_scalar_prefetch=0,
            grid=(nblk,),
            in_specs=[
                pl.BlockSpec((TM, IN_FEATURES), lambda i: (i, 0)),    # x (pipelined)
                pl.BlockSpec((IN_FEATURES, H1P), const),              # w1
                pl.BlockSpec((1, H1P), const),                        # b1
                pl.BlockSpec((H1P, H2P), const),                      # w2
                pl.BlockSpec((1, H2P), const),                        # b2
                pl.BlockSpec((H2P, OUTP), const),                     # w3
                pl.BlockSpec((1, OUTP), const),                       # b3
            ],
            out_specs=pl.BlockSpec((TM, OUTP), lambda i: (i, 0)),
        ),
        compiler_params=pltpu.CompilerParams(
            dimension_semantics=("parallel",)),   # batch tiles sharded over TCs (v7x)
        cost_estimate=cost,
    )(x, w1, b1, w2, b2, w3, b3)

    return out[:B, :OUT].astype(jnp.float32)


def init_params(key):
    """Deterministic init matching PyTorch Linear shapes (stored transposed: (in, out))."""
    ks = jax.random.split(key, 6)

    def lin(kw, kb, fan_in, fan_out):
        bound = 1.0 / jnp.sqrt(fan_in)
        w = jax.random.uniform(kw, (fan_in, fan_out), jnp.float32, -bound, bound)
        b = jax.random.uniform(kb, (1, fan_out), jnp.float32, -bound, bound)
        return w, b

    w1, b1 = lin(ks[0], ks[1], IN_FEATURES, H1)
    w2, b2 = lin(ks[2], ks[3], H1, H2)
    w3, b3 = lin(ks[4], ks[5], H2, OUT)
    return (w1, b1, w2, b2, w3, b3)


def prepare_kernel_params(params):
    """Zero-pad the narrow dims to lane width and cast weights to bf16 (biases stay f32).
    Zero padding is exact: padded H1/H2 columns stay 0 through bias+ReLU and contribute 0."""
    w1, b1, w2, b2, w3, b3 = params
    pad2 = lambda a, r, c: jnp.pad(a, ((0, r - a.shape[0]), (0, c - a.shape[1])))
    w1p = pad2(w1, IN_FEATURES, H1P).astype(jnp.bfloat16)
    b1p = pad2(b1, 1, H1P)
    w2p = pad2(w2, H1P, H2P).astype(jnp.bfloat16)
    b2p = pad2(b2, 1, H2P)
    w3p = pad2(w3, H2P, OUTP).astype(jnp.bfloat16)
    b3p = pad2(b3, 1, OUTP)
    return (w1p, b1p, w2p, b2p, w3p, b3p)


def reference_forward(x_nchw, params):
    """Mixed-precision reference mirroring the kernel (bf16 weights/activations,
    f32 accumulation and biases; f32 output)."""
    w1, b1, w2, b2, w3, b3 = params
    x = x_nchw.reshape(x_nchw.shape[0], -1).astype(jnp.bfloat16)
    h1 = jnp.maximum(jnp.dot(x, w1.astype(jnp.bfloat16),
                             preferred_element_type=jnp.float32) + b1, 0.0)
    h2 = jnp.maximum(jnp.dot(h1.astype(jnp.bfloat16), w2.astype(jnp.bfloat16),
                             preferred_element_type=jnp.float32) + b2, 0.0)
    return jnp.dot(h2.astype(jnp.bfloat16), w3.astype(jnp.bfloat16),
                   preferred_element_type=jnp.float32) + b3


if __name__ == "__main__":
    key = jax.random.PRNGKey(0)
    kx, kp = jax.random.split(key)
    # Input consistent with the module: feature maps of shape (B, 32, 3, 10)
    x = jax.random.normal(kx, (2, 32, 3, 10), jnp.float32)
    params = init_params(kp)
    kparams = prepare_kernel_params(params)

    out = output_layer_forward(x, kparams)
    out = jax.block_until_ready(out)

    ref = reference_forward(x, params)
    assert out.shape == (2, OUT)
    # bf16 weights + bf16 output store -> loosened tolerance vs. the mixed-precision reference
    assert jnp.allclose(out, ref, atol=2e-2, rtol=2e-2), \
        float(jnp.max(jnp.abs(out - ref)))
    print("KERNEL_OK")
</pallas_src>

<mosaic_0001>
module attributes {stable_mosaic.version = 11 : i64} {
  func.func @mlp_kernel(%arg0: i32, %arg1: memref<16x960xf32, #tpu.memory_space<vmem>>, %arg2: memref<960x512xbf16, #tpu.memory_space<vmem>>, %arg3: memref<1x512xf32, #tpu.memory_space<vmem>>, %arg4: memref<512x128xbf16, #tpu.memory_space<vmem>>, %arg5: memref<1x128xf32, #tpu.memory_space<vmem>>, %arg6: memref<128x128xbf16, #tpu.memory_space<vmem>>, %arg7: memref<1x128xf32, #tpu.memory_space<vmem>>, %arg8: memref<16x128xbf16, #tpu.memory_space<vmem>>) attributes {dimension_semantics = [#tpu.dimension_semantics<parallel>], iteration_bounds = array<i64: 1>, scalar_prefetch = 0 : i64, scratch_operands = 0 : i64, tpu.core_type = #tpu.core_type<tc>, window_params = [{transform_indices = @transform_0, window_bounds = array<i64: 16, 960>}, {pipeline_mode = #tpu.pipeline_mode<synchronous>, transform_indices = @transform_1, window_bounds = array<i64: 960, 512>}, {pipeline_mode = #tpu.pipeline_mode<synchronous>, transform_indices = @transform_2, window_bounds = array<i64: 1, 512>}, {pipeline_mode = #tpu.pipeline_mode<synchronous>, transform_indices = @transform_3, window_bounds = array<i64: 512, 128>}, {pipeline_mode = #tpu.pipeline_mode<synchronous>, transform_indices = @transform_4, window_bounds = array<i64: 1, 128>}, {pipeline_mode = #tpu.pipeline_mode<synchronous>, transform_indices = @transform_5, window_bounds = array<i64: 128, 128>}, {pipeline_mode = #tpu.pipeline_mode<synchronous>, transform_indices = @transform_6, window_bounds = array<i64: 1, 128>}, {transform_indices = @transform_7, window_bounds = array<i64: 16, 128>}]} {
    %c0 = arith.constant 0 : index
    %c0_0 = arith.constant 0 : index
    %0 = vector.load %arg1[%c0, %c0_0] : memref<16x960xf32, #tpu.memory_space<vmem>>, vector<16x960xf32>
    %1 = arith.truncf %0 : vector<16x960xf32> to vector<16x960xbf16>
    %c0_1 = arith.constant 0 : index
    %c0_2 = arith.constant 0 : index
    %2 = vector.load %arg2[%c0_1, %c0_2] : memref<960x512xbf16, #tpu.memory_space<vmem>>, vector<960x512xbf16>
    %cst = arith.constant dense<0.000000e+00> : vector<16x512xf32>
    %3 = tpu.matmul %1, %2, %cst {dimension_numbers = #tpu.dot_dimension_numbers<[1], [0], [0], [1], [0, 0, 1, 1], [], []>} : vector<16x960xbf16>, vector<960x512xbf16>, vector<16x512xf32> -> vector<16x512xf32>
    %c0_3 = arith.constant 0 : index
    %c0_4 = arith.constant 0 : index
    %4 = vector.load %arg3[%c0_3, %c0_4] : memref<1x512xf32, #tpu.memory_space<vmem>>, vector<1x512xf32>
    %5 = vector.broadcast %4 : vector<1x512xf32> to vector<16x512xf32>
    %6 = arith.addf %3, %5 : vector<16x512xf32>
    %cst_5 = arith.constant 0.000000e+00 : f32
    %7 = vector.broadcast %cst_5 : f32 to vector<16x512xf32>
    %8 = arith.maximumf %6, %7 : vector<16x512xf32>
    %9 = arith.truncf %8 : vector<16x512xf32> to vector<16x512xbf16>
    %c0_6 = arith.constant 0 : index
    %c0_7 = arith.constant 0 : index
    %10 = vector.load %arg4[%c0_6, %c0_7] : memref<512x128xbf16, #tpu.memory_space<vmem>>, vector<512x128xbf16>
    %cst_8 = arith.constant dense<0.000000e+00> : vector<16x128xf32>
    %11 = tpu.matmul %9, %10, %cst_8 {dimension_numbers = #tpu.dot_dimension_numbers<[1], [0], [0], [1], [0, 0, 1, 1], [], []>} : vector<16x512xbf16>, vector<512x128xbf16>, vector<16x128xf32> -> vector<16x128xf32>
    %c0_9 = arith.constant 0 : index
    %c0_10 = arith.constant 0 : index
    %12 = vector.load %arg5[%c0_9, %c0_10] : memref<1x128xf32, #tpu.memory_space<vmem>>, vector<1x128xf32>
    %13 = vector.broadcast %12 : vector<1x128xf32> to vector<16x128xf32>
    %14 = arith.addf %11, %13 : vector<16x128xf32>
    %cst_11 = arith.constant 0.000000e+00 : f32
    %15 = vector.broadcast %cst_11 : f32 to vector<16x128xf32>
    %16 = arith.maximumf %14, %15 : vector<16x128xf32>
    %17 = arith.truncf %16 : vector<16x128xf32> to vector<16x128xbf16>
    %c0_12 = arith.constant 0 : index
    %c0_13 = arith.constant 0 : index
    %18 = vector.load %arg6[%c0_12, %c0_13] : memref<128x128xbf16, #tpu.memory_space<vmem>>, vector<128x128xbf16>
    %cst_14 = arith.constant dense<0.000000e+00> : vector<16x128xf32>
    %19 = tpu.matmul %17, %18, %cst_14 {dimension_numbers = #tpu.dot_dimension_numbers<[1], [0], [0], [1], [0, 0, 1, 1], [], []>} : vector<16x128xbf16>, vector<128x128xbf16>, vector<16x128xf32> -> vector<16x128xf32>
    %c0_15 = arith.constant 0 : index
    %c0_16 = arith.constant 0 : index
    %20 = vector.load %arg7[%c0_15, %c0_16] : memref<1x128xf32, #tpu.memory_space<vmem>>, vector<1x128xf32>
    %21 = vector.broadcast %20 : vector<1x128xf32> to vector<16x128xf32>
    %22 = arith.addf %19, %21 : vector<16x128xf32>
    %23 = arith.truncf %22 : vector<16x128xf32> to vector<16x128xbf16>
    %c0_17 = arith.constant 0 : index
    %c0_18 = arith.constant 0 : index
    %24 = vector.load %arg8[%c0_17, %c0_18] : memref<16x128xbf16, #tpu.memory_space<vmem>>, vector<16x128xbf16>
    tpu.vector_store %arg8[%c0_17, %c0_18], %23 {strides = array<i32>} : memref<16x128xbf16, #tpu.memory_space<vmem>>, vector<16x128xbf16>,
    return
  }
  func.func @transform_0(%arg0: i32) -> (i32, i32) {
    %c0_i32 = arith.constant 0 : i32
    %c0_i32_0 = arith.constant 0 : i32
    return %arg0, %c0_i32 : i32, i32
  }
  func.func @transform_1(%arg0: i32) -> (i32, i32) {
    %c0_i32 = arith.constant 0 : i32
    %c0_i32_0 = arith.constant 0 : i32
    %c0_i32_1 = arith.constant 0 : i32
    return %c0_i32, %c0_i32_0 : i32, i32
  }
  func.func @transform_2(%arg0: i32) -> (i32, i32) {
    %c0_i32 = arith.constant 0 : i32
    %c0_i32_0 = arith.constant 0 : i32
    %c0_i32_1 = arith.constant 0 : i32
    return %c0_i32, %c0_i32_0 : i32, i32
  }
  func.func @transform_3(%arg0: i32) -> (i32, i32) {
    %c0_i32 = arith.constant 0 : i32
    %c0_i32_0 = arith.constant 0 : i32
    %c0_i32_1 = arith.constant 0 : i32
    return %c0_i32, %c0_i32_0 : i32, i32
  }
  func.func @transform_4(%arg0: i32) -> (i32, i32) {
    %c0_i32 = arith.constant 0 : i32
    %c0_i32_0 = arith.constant 0 : i32
    %c0_i32_1 = arith.constant 0 : i32
    return %c0_i32, %c0_i32_0 : i32, i32
  }
  func.func @transform_5(%arg0: i32) -> (i32, i32) {
    %c0_i32 = arith.constant 0 : i32
    %c0_i32_0 = arith.constant 0 : i32
    %c0_i32_1 = arith.constant 0 : i32
    return %c0_i32, %c0_i32_0 : i32, i32
  }
  func.func @transform_6(%arg0: i32) -> (i32, i32) {
    %c0_i32 = arith.constant 0 : i32
    %c0_i32_0 = arith.constant 0 : i32
    %c0_i32_1 = arith.constant 0 : i32
    return %c0_i32, %c0_i32_0 : i32, i32
  }
  func.func @transform_7(%arg0: i32) -> (i32, i32) {
    %c0_i32 = arith.constant 0 : i32
    %c0_i32_0 = arith.constant 0 : i32
    return %arg0, %c0_i32 : i32, i32
  }
}

</mosaic_0001>

<llo_original>
// kernel: tpu_custom_call.1
$region0: #{tpu_custom_call.1}
  #allocation0 [shape = 'u32[]', space=smem, size = 0x4, offset = 0x4, fixed_abs, tag = 'smem constant byte address 0x4 - core index']
  #allocation1 [shape = 'u32[72,128]{1,0:T(1,128)}', space=vmem, size = 0x9000, scoped, tag = 'internal scratch']
  %s0 = inlined_call_operand.hbm [shape: f32[16,960], index: 0, kind: input, shape index: {}]
  %s1 = inlined_call_operand.hbm [shape: bf16[960,512], index: 1, kind: input, shape index: {}]
  %s2 = inlined_call_operand.hbm [shape: f32[1,512], index: 2, kind: input, shape index: {}]
  %s3 = inlined_call_operand.hbm [shape: bf16[512,128], index: 3, kind: input, shape index: {}]
  %s4 = inlined_call_operand.vmem [shape: f32[1,128], index: 4, kind: input, shape index: {}]
  %s5 = inlined_call_operand.hbm [shape: bf16[128,128], index: 5, kind: input, shape index: {}]
  %s6 = inlined_call_operand.vmem [shape: f32[1,128], index: 6, kind: input, shape index: {}]
  %s7 = inlined_call_operand.hbm [shape: bf16[16,128], index: 7, kind: output, shape index: {}]
  %s8 = sld [smem:[#allocation0]]
  $region58: #{tpu_custom_call.1} parent=0
    _
  %s10 = ssub.s32 1, %s8
  %s11 = scalar_select 0, %s10, %s8
  $region1: #{tpu_custom_call.1} parent=0
    #allocation2 [shape = 'u8[65536]{0}', space=vmem, size = 0x10000, scoped, tag = 'input window, operand 0, single buffered']
    #allocation3 [shape = 's32[1]{0}', space=sflag, size = 0x4, scoped, tag = 'scoped memory for tpu_custom_call.1']
    #allocation4 [shape = 's32[1]{0}', space=sflag, size = 0x4, scoped, tag = 'scoped memory for tpu_custom_call.1']
    #allocation5 [shape = 'u8[983040]{0}', space=vmem, size = 0xf0000, scoped, tag = 'input window, operand 1, single buffered']
    #allocation6 [shape = 's32[1]{0}', space=sflag, size = 0x4, scoped, tag = 'scoped memory for tpu_custom_call.1']
    #allocation7 [shape = 'u8[2048]{0}', space=vmem, size = 0x800, scoped, tag = 'input window, operand 2, single buffered']
    #allocation8 [shape = 'u8[131072]{0}', space=vmem, size = 0x20000, scoped, tag = 'input window, operand 3, single buffered']
    #allocation9 [shape = 's32[1]{0}', space=sflag, size = 0x4, scoped, tag = 'scoped memory for tpu_custom_call.1']
    #allocation10 [shape = 'u8[32768]{0}', space=vmem, size = 0x8000, scoped, tag = 'input window, operand 5, single buffered']
    #allocation11 [shape = 'u8[4096]{0}', space=vmem, size = 0x1000, scoped, tag = 'output window, operand 0, single buffered']
    %12 = vsyncpa [#allocation3], 0
    %13 = vsyncpa [#allocation6], 0
    %14 = vsyncpa [#allocation9], 0
    %15 = vsyncpa [#allocation4], 0
    // Predicated region
    $region2: #{tpu_custom_call.1} parent=1 // pred_check
      _
    $region3: #{tpu_custom_call.1} parent=1 // pred_check_branch
      %17 = sbr.rel (0) target = $region5
    $region4: #{tpu_custom_call.1} parent=1 // pred_region
      %19 = vsyncadd [#allocation3], 0
      %s20 = sshll.u32 %s0, 4
      %s21 = int_to_ptr.hbm [resolvable:$true] %s20
      %s22 = sshll.u32 [#allocation2], 4
      %s23 = int_to_ptr.vmem [resolvable:$true] %s22
      %28 = dma.hbm_to_vmem [thread:$0]  %s21, 2048, %s23, [#allocation3], 1024, 1024, 64
    $region5: #{tpu_custom_call.1} parent=1 // pred_fallthru
      _
    // Predicated region
    $region6: #{tpu_custom_call.1} parent=1 // pred_check
      _
    $region7: #{tpu_custom_call.1} parent=1 // pred_check_branch
      %30 = sbr.rel (0) target = $region9
    $region8: #{tpu_custom_call.1} parent=1 // pred_region
      %32 = vsyncadd [#allocation6], 0
      %s33 = sshll.u32 %s1, 4
      %s34 = int_to_ptr.hbm [resolvable:$true] %s33
      %s35 = sshll.u32 [#allocation5], 4
      %s36 = int_to_ptr.vmem [resolvable:$true] %s35
      %41 = dma.hbm_to_vmem [thread:$0]  %s34, 30720, %s36, [#allocation6], 256, 256, 16
    $region9: #{tpu_custom_call.1} parent=1 // pred_fallthru
      _
    // Predicated region
    $region10: #{tpu_custom_call.1} parent=1 // pred_check
      _
    $region11: #{tpu_custom_call.1} parent=1 // pred_check_branch
      %43 = sbr.rel (0) target = $region13
    $region12: #{tpu_custom_call.1} parent=1 // pred_region
      %45 = vsyncadd [#allocation6], 0
      %s47 = sshll.u32 %s2, 4
      %s48 = int_to_ptr.hbm [resolvable:$true] %s47
      %s49 = sshll.u32 [#allocation7], 4
      %s50 = int_to_ptr.vmem [resolvable:$true] %s49
      %52 = dma.hbm_to_vmem [thread:$0]  %s48, 64, %s50, [#allocation6]
    $region13: #{tpu_custom_call.1} parent=1 // pred_fallthru
      _
    // Predicated region
    $region14: #{tpu_custom_call.1} parent=1 // pred_check
      _
    $region15: #{tpu_custom_call.1} parent=1 // pred_check_branch
      %54 = sbr.rel (0) target = $region17
    $region16: #{tpu_custom_call.1} parent=1 // pred_region
      %56 = vsyncadd [#allocation9], 0
      %s57 = sshll.u32 %s3, 4
      %s58 = int_to_ptr.hbm [resolvable:$true] %s57
      %s59 = sshll.u32 [#allocation8], 4
      %s60 = int_to_ptr.vmem [resolvable:$true] %s59
      %65 = dma.hbm_to_vmem [thread:$0]  %s58, 4096, %s60, [#allocation9], 64, 64, 4
    $region17: #{tpu_custom_call.1} parent=1 // pred_fallthru
      _
    // Predicated region
    $region18: #{tpu_custom_call.1} parent=1 // pred_check
      _
    $region19: #{tpu_custom_call.1} parent=1 // pred_check_branch
      %67 = sbr.rel (0) target = $region21
    $region20: #{tpu_custom_call.1} parent=1 // pred_region
      _
    $region21: #{tpu_custom_call.1} parent=1 // pred_fallthru
      _
    // Predicated region
    $region22: #{tpu_custom_call.1} parent=1 // pred_check
      _
    $region23: #{tpu_custom_call.1} parent=1 // pred_check_branch
      %69 = sbr.rel (0) target = $region25
    $region24: #{tpu_custom_call.1} parent=1 // pred_region
      %71 = vsyncadd [#allocation9], 0
      %s72 = sshll.u32 %s5, 4
      %s73 = int_to_ptr.hbm [resolvable:$true] %s72
      %s74 = sshll.u32 [#allocation10], 4
      %s75 = int_to_ptr.vmem [resolvable:$true] %s74
      %80 = dma.hbm_to_vmem [thread:$0]  %s73, 1024, %s75, [#allocation9], 64, 64, 4
    $region25: #{tpu_custom_call.1} parent=1 // pred_fallthru
      _
    // Predicated region
    $region26: #{tpu_custom_call.1} parent=1 // pred_check
      _
    $region27: #{tpu_custom_call.1} parent=1 // pred_check_branch
      %82 = sbr.rel (0) target = $region29
    $region28: #{tpu_custom_call.1} parent=1 // pred_region
      _
    $region29: #{tpu_custom_call.1} parent=1 // pred_fallthru
      _
    // Predicated region
    $region30: #{tpu_custom_call.1} parent=1 // pred_check
      _
    $region31: #{tpu_custom_call.1} parent=1 // pred_check_branch
      %84 = sbr.rel (0) target = $region33
    $region32: #{tpu_custom_call.1} parent=1 // pred_region
      %86 = dma.done [#allocation3], 2048
    $region33: #{tpu_custom_call.1} parent=1 // pred_fallthru
      _
    // Predicated region
    $region34: #{tpu_custom_call.1} parent=1 // pred_check
      _
    $region35: #{tpu_custom_call.1} parent=1 // pred_check_branch
      %88 = sbr.rel (0) target = $region37
    $region36: #{tpu_custom_call.1} parent=1 // pred_region
      %90 = dma.done [#allocation6], 30720
    $region37: #{tpu_custom_call.1} parent=1 // pred_fallthru
      _
    // Predicated region
    $region38: #{tpu_custom_call.1} parent=1 // pred_check
      _
    $region39: #{tpu_custom_call.1} parent=1 // pred_check_branch
      %92 = sbr.rel (0) target = $region41
    $region40: #{tpu_custom_call.1} parent=1 // pred_region
      %94 = dma.done [#allocation6], 64
    $region41: #{tpu_custom_call.1} parent=1 // pred_fallthru
      _
    // Predicated region
    $region42: #{tpu_custom_call.1} parent=1 // pred_check
      _
    $region43: #{tpu_custom_call.1} parent=1 // pred_check_branch
      %96 = sbr.rel (0) target = $region45
    $region44: #{tpu_custom_call.1} parent=1 // pred_region
      %98 = dma.done [#allocation9], 4096
    $region45: #{tpu_custom_call.1} parent=1 // pred_fallthru
      _
    // Predicated region
    $region46: #{tpu_custom_call.1} parent=1 // pred_check
      _
    $region47: #{tpu_custom_call.1} parent=1 // pred_check_branch
      %100 = sbr.rel (0) target = $region49
    $region48: #{tpu_custom_call.1} parent=1 // pred_region
      %102 = dma.done [#allocation9], 1024
    $region49: #{tpu_custom_call.1} parent=1 // pred_fallthru
      _
    %v104 = vld [vmem:[#allocation2] sm:$0xff]
    %v105 = vld [vmem:[#allocation2 + $0x8] sm:$0xff]
    %v106 = vld [vmem:[#allocation2 + $0x10] sm:$0xff]
    %v107 = vld [vmem:[#allocation2 + $0x18] sm:$0xff]
    %v108 = vld [vmem:[#allocation2 + $0x20] sm:$0xff]
    %v109 = vld [vmem:[#allocation2 + $0x28] sm:$0xff]
    %v110 = vld [vmem:[#allocation2 + $0x30] sm:$0xff]
    %v111 = vld [vmem:[#allocation2 + $0x38] sm:$0xff]
    %v112 = vld [vmem:[#allocation2 + $0x40] sm:$0xff]
    %v113 = vld [vmem:[#allocation2 + $0x48] sm:$0xff]
    %v114 = vld [vmem:[#allocation2 + $0x50] sm:$0xff]
    %v115 = vld [vmem:[#allocation2 + $0x58] sm:$0xff]
    %v116 = vld [vmem:[#allocation2 + $0x60] sm:$0xff]
    %v117 = vld [vmem:[#allocation2 + $0x68] sm:$0xff]
    %v118 = vld [vmem:[#allocation2 + $0x70] sm:$0xff]
    %v119 = vld [vmem:[#allocation2 + $0x78] sm:$0xff]
    %v120 = vpack.c.bf16 %v112, %v104
    %v121 = vpack.c.bf16 %v113, %v105
    %v122 = vpack.c.bf16 %v114, %v106
    %v123 = vpack.c.bf16 %v115, %v107
    %v124 = vpack.c.bf16 %v116, %v108
    %v125 = vpack.c.bf16 %v117, %v109
    %v126 = vpack.c.bf16 %v118, %v110
    %v127 = vpack.c.bf16 %v119, %v111
    %v128 = vld [vmem:[#allocation5] sm:$0xff]
    %v129 = vld [vmem:[#allocation5 + $0x8] sm:$0xff]
    %v130 = vld [vmem:[#allocation5 + $0x10] sm:$0xff]
    %v131 = vld [vmem:[#allocation5 + $0x18] sm:$0xff]
    %v132 = vld [vmem:[#allocation5 + $0x20] sm:$0xff]
    %v133 = vld [vmem:[#allocation5 + $0x28] sm:$0xff]
    %v134 = vld [vmem:[#allocation5 + $0x30] sm:$0xff]
    %v135 = vld [vmem:[#allocation5 + $0x38] sm:$0xff]
    %v136 = vld [vmem:[#allocation5 + $0x40] sm:$0xff]
    %v137 = vld [vmem:[#allocation5 + $0x48] sm:$0xff]
    %v138 = vld [vmem:[#allocation5 + $0x50] sm:$0xff]
    %v139 = vld [vmem:[#allocation5 + $0x58] sm:$0xff]
    %v140 = vld [vmem:[#allocation5 + $0x60] sm:$0xff]
    %v141 = vld [vmem:[#allocation5 + $0x68] sm:$0xff]
    %v142 = vld [vmem:[#allocation5 + $0x70] sm:$0xff]
    %v143 = vld [vmem:[#allocation5 + $0x78] sm:$0xff]
    %v144 = vld [vmem:[#allocation5 + $0x80] sm:$0xff]
    %v145 = vld [vmem:[#allocation5 + $0x88] sm:$0xff]
    %v146 = vld [vmem:[#allocation5 + $0x90] sm:$0xff]
    %v147 = vld [vmem:[#allocation5 + $0x98] sm:$0xff]
    %v148 = vld [vmem:[#allocation5 + $0xa0] sm:$0xff]
    %v149 = vld [vmem:[#allocation5 + $0xa8] sm:$0xff]
    %v150 = vld [vmem:[#allocation5 + $0xb0] sm:$0xff]
    %v151 = vld [vmem:[#allocation5 + $0xb8] sm:$0xff]
    %v152 = vld [vmem:[#allocation5 + $0xc0] sm:$0xff]
    %v153 = vld [vmem:[#allocation5 + $0xc8] sm:$0xff]
    %v154 = vld [vmem:[#allocation5 + $0xd0] sm:$0xff]
    %v155 = vld [vmem:[#allocation5 + $0xd8] sm:$0xff]
    %v156 = vld [vmem:[#allocation5 + $0xe0] sm:$0xff]
    %v157 = vld [vmem:[#allocation5 + $0xe8] sm:$0xff]
    %v158 = vld [vmem:[#allocation5 + $0xf0] sm:$0xff]
    %v159 = vld [vmem:[#allocation5 + $0xf8] sm:$0xff]
    %v160 = vld [vmem:[#allocation5 + $0x100] sm:$0xff]
    %v161 = vld [vmem:[#allocation5 + $0x108] sm:$0xff]
    %v162 = vld [vmem:[#allocation5 + $0x110] sm:$0xff]
    %v163 = vld [vmem:[#allocation5 + $0x118] sm:$0xff]
    %v164 = vld [vmem:[#allocation5 + $0x120] sm:$0xff]
    %v165 = vld [vmem:[#allocation5 + $0x128] sm:$0xff]
    %v166 = vld [vmem:[#allocation5 + $0x130] sm:$0xff]
    %v167 = vld [vmem:[#allocation5 + $0x138] sm:$0xff]
    %v168 = vld [vmem:[#allocation5 + $0x140] sm:$0xff]
    %v169 = vld [vmem:[#allocation5 + $0x148] sm:$0xff]
    %v170 = vld [vmem:[#allocation5 + $0x150] sm:$0xff]
    %v171 = vld [vmem:[#allocation5 + $0x158] sm:$0xff]
    %v172 = vld [vmem:[#allocation5 + $0x160] sm:$0xff]
    %v173 = vld [vmem:[#allocation5 + $0x168] sm:$0xff]
    %v174 = vld [vmem:[#allocation5 + $0x170] sm:$0xff]
    %v175 = vld [vmem:[#allocation5 + $0x178] sm:$0xff]
    %v176 = vld [vmem:[#allocation5 + $0x180] sm:$0xff]
    %v177 = vld [vmem:[#allocation5 + $0x188] sm:$0xff]
    %v178 = vld [vmem:[#allocation5 + $0x190] sm:$0xff]
    %v179 = vld [vmem:[#allocation5 + $0x198] sm:$0xff]
    %v180 = vld [vmem:[#allocation5 + $0x1a0] sm:$0xff]
    %v181 = vld [vmem:[#allocation5 + $0x1a8] sm:$0xff]
    %v182 = vld [vmem:[#allocation5 + $0x1b0] sm:$0xff]
    %v183 = vld [vmem:[#allocation5 + $0x1b8] sm:$0xff]
    %v184 = vld [vmem:[#allocation5 + $0x1c0] sm:$0xff]
    %v185 = vld [vmem:[#allocation5 + $0x1c8] sm:$0xff]
    %v186 = vld [vmem:[#allocation5 + $0x1d0] sm:$0xff]
    %v187 = vld [vmem:[#allocation5 + $0x1d8] sm:$0xff]
    %v188 = vld [vmem:[#allocation5 + $0x1e0] sm:$0xff]
    %v189 = vld [vmem:[#allocation5 + $0x1e8] sm:$0xff]
    %v190 = vld [vmem:[#allocation5 + $0x1f0] sm:$0xff]
    %v191 = vld [vmem:[#allocation5 + $0x1f8] sm:$0xff]
    %v192 = vld [vmem:[#allocation5 + $0x200] sm:$0xff]
    %v193 = vld [vmem:[#allocation5 + $0x208] sm:$0xff]
    %v194 = vld [vmem:[#allocation5 + $0x210] sm:$0xff]
    %v195 = vld [vmem:[#allocation5 + $0x218] sm:$0xff]
    %v196 = vld [vmem:[#allocation5 + $0x220] sm:$0xff]
    %v197 = vld [vmem:[#allocation5 + $0x228] sm:$0xff]
    %v198 = vld [vmem:[#allocation5 + $0x230] sm:$0xff]
    %v199 = vld [vmem:[#allocation5 + $0x238] sm:$0xff]
    %v200 = vld [vmem:[#allocation5 + $0x240] sm:$0xff]
    %v201 = vld [vmem:[#allocation5 + $0x248] sm:$0xff]
    %v202 = vld [vmem:[#allocation5 + $0x250] sm:$0xff]
    %v203 = vld [vmem:[#allocation5 + $0x258] sm:$0xff]
    %v204 = vld [vmem:[#allocation5 + $0x260] sm:$0xff]
    %v205 = vld [vmem:[#allocation5 + $0x268] sm:$0xff]
    %v206 = vld [vmem:[#allocation5 + $0x270] sm:$0xff]
    %v207 = vld [vmem:[#allocation5 + $0x278] sm:$0xff]
    %v208 = vld [vmem:[#allocation5 + $0x280] sm:$0xff]
    %v209 = vld [vmem:[#allocation5 + $0x288] sm:$0xff]
    %v210 = vld [vmem:[#allocation5 + $0x290] sm:$0xff]
    %v211 = vld [vmem:[#allocation5 + $0x298] sm:$0xff]
    %v212 = vld [vmem:[#allocation5 + $0x2a0] sm:$0xff]
    %v213 = vld [vmem:[#allocation5 + $0x2a8] sm:$0xff]
    %v214 = vld [vmem:[#allocation5 + $0x2b0] sm:$0xff]
    %v215 = vld [vmem:[#allocation5 + $0x2b8] sm:$0xff]
    %v216 = vld [vmem:[#allocation5 + $0x2c0] sm:$0xff]
    %v217 = vld [vmem:[#allocation5 + $0x2c8] sm:$0xff]
    %v218 = vld [vmem:[#allocation5 + $0x2d0] sm:$0xff]
    %v219 = vld [vmem:[#allocation5 + $0x2d8] sm:$0xff]
    %v220 = vld [vmem:[#allocation5 + $0x2e0] sm:$0xff]
    %v221 = vld [vmem:[#allocation5 + $0x2e8] sm:$0xff]
    %v222 = vld [vmem:[#allocation5 + $0x2f0] sm:$0xff]
    %v223 = vld [vmem:[#allocation5 + $0x2f8] sm:$0xff]
    %v224 = vld [vmem:[#allocation5 + $0x300] sm:$0xff]
    %v225 = vld [vmem:[#allocation5 + $0x308] sm:$0xff]
    %v226 = vld [vmem:[#allocation5 + $0x310] sm:$0xff]
    %v227 = vld [vmem:[#allocation5 + $0x318] sm:$0xff]
    %v228 = vld [vmem:[#allocation5 + $0x320] sm:$0xff]
    %v229 = vld [vmem:[#allocation5 + $0x328] sm:$0xff]
    %v230 = vld [vmem:[#allocation5 + $0x330] sm:$0xff]
    %v231 = vld [vmem:[#allocation5 + $0x338] sm:$0xff]
    %v232 = vld [vmem:[#allocation5 + $0x340] sm:$0xff]
    %v233 = vld [vmem:[#allocation5 + $0x348] sm:$0xff]
    %v234 = vld [vmem:[#allocation5 + $0x350] sm:$0xff]
    %v235 = vld [vmem:[#allocation5 + $0x358] sm:$0xff]
    %v236 = vld [vmem:[#allocation5 + $0x360] sm:$0xff]
    %v237 = vld [vmem:[#allocation5 + $0x368] sm:$0xff]
    %v238 = vld [vmem:[#allocation5 + $0x370] sm:$0xff]
    %v239 = vld [vmem:[#allocation5 + $0x378] sm:$0xff]
    %v240 = vld [vmem:[#allocation5 + $0x380] sm:$0xff]
    %v241 = vld [vmem:[#allocation5 + $0x388] sm:$0xff]
    %v242 = vld [vmem:[#allocation5 + $0x390] sm:$0xff]
    %v243 = vld [vmem:[#allocation5 + $0x398] sm:$0xff]
    %v244 = vld [vmem:[#allocation5 + $0x3a0] sm:$0xff]
    %v245 = vld [vmem:[#allocation5 + $0x3a8] sm:$0xff]
    %v246 = vld [vmem:[#allocation5 + $0x3b0] sm:$0xff]
    %v247 = vld [vmem:[#allocation5 + $0x3b8] sm:$0xff]
    %v248 = vld [vmem:[#allocation5 + $0x3c0] sm:$0xff]
    %v249 = vld [vmem:[#allocation5 + $0x3c8] sm:$0xff]
    %v250 = vld [vmem:[#allocation5 + $0x3d0] sm:$0xff]
    %v251 = vld [vmem:[#allocation5 + $0x3d8] sm:$0xff]
    %v252 = vld [vmem:[#allocation5 + $0x3e0] sm:$0xff]
    %v253 = vld [vmem:[#allocation5 + $0x3e8] sm:$0xff]
    %v254 = vld [vmem:[#allocation5 + $0x3f0] sm:$0xff]
    %v255 = vld [vmem:[#allocation5 + $0x3f8] sm:$0xff]
    %v256 = vld [vmem:[#allocation5 + $0x400] sm:$0xff]
    %v257 = vld [vmem:[#allocation5 + $0x408] sm:$0xff]
    %v258 = vld [vmem:[#allocation5 + $0x410] sm:$0xff]
    %v259 = vld [vmem:[#allocation5 + $0x418] sm:$0xff]
    %v260 = vld [vmem:[#allocation5 + $0x420] sm:$0xff]
    %v261 = vld [vmem:[#allocation5 + $0x428] sm:$0xff]
    %v262 = vld [vmem:[#allocation5 + $0x430] sm:$0xff]
    %v263 = vld [vmem:[#allocation5 + $0x438] sm:$0xff]
    %v264 = vld [vmem:[#allocation5 + $0x440] sm:$0xff]
    %v265 = vld [vmem:[#allocation5 + $0x448] sm:$0xff]
    %v266 = vld [vmem:[#allocation5 + $0x450] sm:$0xff]
    %v267 = vld [vmem:[#allocation5 + $0x458] sm:$0xff]
    %v268 = vld [vmem:[#allocation5 + $0x460] sm:$0xff]
    %v269 = vld [vmem:[#allocation5 + $0x468] sm:$0xff]
    %v270 = vld [vmem:[#allocation5 + $0x470] sm:$0xff]
    %v271 = vld [vmem:[#allocation5 + $0x478] sm:$0xff]
    %v272 = vld [vmem:[#allocation5 + $0x480] sm:$0xff]
    %v273 = vld [vmem:[#allocation5 + $0x488] sm:$0xff]
    %v274 = vld [vmem:[#allocation5 + $0x490] sm:$0xff]
    %v275 = vld [vmem:[#allocation5 + $0x498] sm:$0xff]
    %v276 = vld [vmem:[#allocation5 + $0x4a0] sm:$0xff]
    %v277 = vld [vmem:[#allocation5 + $0x4a8] sm:$0xff]
    %v278 = vld [vmem:[#allocation5 + $0x4b0] sm:$0xff]
    %v279 = vld [vmem:[#allocation5 + $0x4b8] sm:$0xff]
    %v280 = vld [vmem:[#allocation5 + $0x4c0] sm:$0xff]
    %v281 = vld [vmem:[#allocation5 + $0x4c8] sm:$0xff]
    %v282 = vld [vmem:[#allocation5 + $0x4d0] sm:$0xff]
    %v283 = vld [vmem:[#allocation5 + $0x4d8] sm:$0xff]
    %v284 = vld [vmem:[#allocation5 + $0x4e0] sm:$0xff]
    %v285 = vld [vmem:[#allocation5 + $0x4e8] sm:$0xff]
    %v286 = vld [vmem:[#allocation5 + $0x4f0] sm:$0xff]
    %v287 = vld [vmem:[#allocation5 + $0x4f8] sm:$0xff]
    %v288 = vld [vmem:[#allocation5 + $0x500] sm:$0xff]
    %v289 = vld [vmem:[#allocation5 + $0x508] sm:$0xff]
    %v290 = vld [vmem:[#allocation5 + $0x510] sm:$0xff]
    %v291 = vld [vmem:[#allocation5 + $0x518] sm:$0xff]
    %v292 = vld [vmem:[#allocation5 + $0x520] sm:$0xff]
    %v293 = vld [vmem:[#allocation5 + $0x528] sm:$0xff]
    %v294 = vld [vmem:[#allocation5 + $0x530] sm:$0xff]
    %v295 = vld [vmem:[#allocation5 + $0x538] sm:$0xff]
    %v296 = vld [vmem:[#allocation5 + $0x540] sm:$0xff]
    %v297 = vld [vmem:[#allocation5 + $0x548] sm:$0xff]
    %v298 = vld [vmem:[#allocation5 + $0x550] sm:$0xff]
    %v299 = vld [vmem:[#allocation5 + $0x558] sm:$0xff]
    %v300 = vld [vmem:[#allocation5 + $0x560] sm:$0xff]
    %v301 = vld [vmem:[#allocation5 + $0x568] sm:$0xff]
    %v302 = vld [vmem:[#allocation5 + $0x570] sm:$0xff]
    %v303 = vld [vmem:[#allocation5 + $0x578] sm:$0xff]
    %v304 = vld [vmem:[#allocation5 + $0x580] sm:$0xff]
    %v305 = vld [vmem:[#allocation5 + $0x588] sm:$0xff]
    %v306 = vld [vmem:[#allocation5 + $0x590] sm:$0xff]
    %v307 = vld [vmem:[#allocation5 + $0x598] sm:$0xff]
    %v308 = vld [vmem:[#allocation5 + $0x5a0] sm:$0xff]
    %v309 = vld [vmem:[#allocation5 + $0x5a8] sm:$0xff]
    %v310 = vld [vmem:[#allocation5 + $0x5b0] sm:$0xff]
    %v311 = vld [vmem:[#allocation5 + $0x5b8] sm:$0xff]
    %v312 = vld [vmem:[#allocation5 + $0x5c0] sm:$0xff]
    %v313 = vld [vmem:[#allocation5 + $0x5c8] sm:$0xff]
    %v314 = vld [vmem:[#allocation5 + $0x5d0] sm:$0xff]
    %v315 = vld [vmem:[#allocation5 + $0x5d8] sm:$0xff]
    %v316 = vld [vmem:[#allocation5 + $0x5e0] sm:$0xff]
    %v317 = vld [vmem:[#allocation5 + $0x5e8] sm:$0xff]
    %v318 = vld [vmem:[#allocation5 + $0x5f0] sm:$0xff]
    %v319 = vld [vmem:[#allocation5 + $0x5f8] sm:$0xff]
    %v320 = vld [vmem:[#allocation5 + $0x600] sm:$0xff]
    %v321 = vld [vmem:[#allocation5 + $0x608] sm:$0xff]
    %v322 = vld [vmem:[#allocation5 + $0x610] sm:$0xff]
    %v323 = vld [vmem:[#allocation5 + $0x618] sm:$0xff]
    %v324 = vld [vmem:[#allocation5 + $0x620] sm:$0xff]
    %v325 = vld [vmem:[#allocation5 + $0x628] sm:$0xff]
    %v326 = vld [vmem:[#allocation5 + $0x630] sm:$0xff]
    %v327 = vld [vmem:[#allocation5 + $0x638] sm:$0xff]
    %v328 = vld [vmem:[#allocation5 + $0x640] sm:$0xff]
    %v329 = vld [vmem:[#allocation5 + $0x648] sm:$0xff]
    %v330 = vld [vmem:[#allocation5 + $0x650] sm:$0xff]
    %v331 = vld [vmem:[#allocation5 + $0x658] sm:$0xff]
    %v332 = vld [vmem:[#allocation5 + $0x660] sm:$0xff]
    %v333 = vld [vmem:[#allocation5 + $0x668] sm:$0xff]
    %v334 = vld [vmem:[#allocation5 + $0x670] sm:$0xff]
    %v335 = vld [vmem:[#allocation5 + $0x678] sm:$0xff]
    %v336 = vld [vmem:[#allocation5 + $0x680] sm:$0xff]
    %v337 = vld [vmem:[#allocation5 + $0x688] sm:$0xff]
    %v338 = vld [vmem:[#allocation5 + $0x690] sm:$0xff]
    %v339 = vld [vmem:[#allocation5 + $0x698] sm:$0xff]
    %v340 = vld [vmem:[#allocation5 + $0x6a0] sm:$0xff]
    %v341 = vld [vmem:[#allocation5 + $0x6a8] sm:$0xff]
    %v342 = vld [vmem:[#allocation5 + $0x6b0] sm:$0xff]
    %v343 = vld [vmem:[#allocation5 + $0x6b8] sm:$0xff]
    %v344 = vld [vmem:[#allocation5 + $0x6c0] sm:$0xff]
    %v345 = vld [vmem:[#allocation5 + $0x6c8] sm:$0xff]
    %v346 = vld [vmem:[#allocation5 + $0x6d0] sm:$0xff]
    %v347 = vld [vmem:[#allocation5 + $0x6d8] sm:$0xff]
    %v348 = vld [vmem:[#allocation5 + $0x6e0] sm:$0xff]
    %v349 = vld [vmem:[#allocation5 + $0x6e8] sm:$0xff]
    %v350 = vld [vmem:[#allocation5 + $0x6f0] sm:$0xff]
    %v351 = vld [vmem:[#allocation5 + $0x6f8] sm:$0xff]
    %v352 = vld [vmem:[#allocation5 + $0x700] sm:$0xff]
    %v353 = vld [vmem:[#allocation5 + $0x708] sm:$0xff]
    %v354 = vld [vmem:[#allocation5 + $0x710] sm:$0xff]
    %v355 = vld [vmem:[#allocation5 + $0x718] sm:$0xff]
    %v356 = vld [vmem:[#allocation5 + $0x720] sm:$0xff]
    %v357 = vld [vmem:[#allocation5 + $0x728] sm:$0xff]
    %v358 = vld [vmem:[#allocation5 + $0x730] sm:$0xff]
    %v359 = vld [vmem:[#allocation5 + $0x738] sm:$0xff]
    %v360 = vld [vmem:[#allocation5 + $0x740] sm:$0xff]
    %v361 = vld [vmem:[#allocation5 + $0x748] sm:$0xff]
    %v362 = vld [vmem:[#allocation5 + $0x750] sm:$0xff]
    %v363 = vld [vmem:[#allocation5 + $0x758] sm:$0xff]
    %v364 = vld [vmem:[#allocation5 + $0x760] sm:$0xff]
    %v365 = vld [vmem:[#allocation5 + $0x768] sm:$0xff]
    %v366 = vld [vmem:[#allocation5 + $0x770] sm:$0xff]
    %v367 = vld [vmem:[#allocation5 + $0x778] sm:$0xff]
    %v368 = vld [vmem:[#allocation7] sm:$0xf]
    %v370 = vperm.slane %v368, 0
    %v371 = vperm.slane %v368, 1
    %v372 = vperm.slane %v368, 2
    %v373 = vperm.slane %v368, 3
    %v618 = vunpack.c.l.b16 %v128
    %v619 = vunpack.c.h.b16 %v128
    %v620 = vunpack.c.l.b16 %v129
    %v621 = vunpack.c.h.b16 %v129
    %v622 = vunpack.c.l.b16 %v130
    %v623 = vunpack.c.h.b16 %v130
    %v624 = vunpack.c.l.b16 %v131
    %v625 = vunpack.c.h.b16 %v131
    %v626 = vunpack.c.l.b16 %v132
    %v627 = vunpack.c.h.b16 %v132
    %v628 = vunpack.c.l.b16 %v133
    %v629 = vunpack.c.h.b16 %v133
    %v630 = vunpack.c.l.b16 %v134
    %v631 = vunpack.c.h.b16 %v134
    %v632 = vunpack.c.l.b16 %v135
    %v633 = vunpack.c.h.b16 %v135
    %v634 = vunpack.c.l.b16 %v136
    %v635 = vunpack.c.h.b16 %v136
    %v636 = vunpack.c.l.b16 %v137
    %v637 = vunpack.c.h.b16 %v137
    %v638 = vunpack.c.l.b16 %v138
    %v639 = vunpack.c.h.b16 %v138
    %v640 = vunpack.c.l.b16 %v139
    %v641 = vunpack.c.h.b16 %v139
    %v642 = vunpack.c.l.b16 %v140
    %v643 = vunpack.c.h.b16 %v140
    %v644 = vunpack.c.l.b16 %v141
    %v645 = vunpack.c.h.b16 %v141
    %v646 = vunpack.c.l.b16 %v142
    %v647 = vunpack.c.h.b16 %v142
    %v648 = vunpack.c.l.b16 %v143
    %v649 = vunpack.c.h.b16 %v143
    %v650 = vunpack.c.l.b16 %v144
    %v651 = vunpack.c.h.b16 %v144
    %v652 = vunpack.c.l.b16 %v145
    %v653 = vunpack.c.h.b16 %v145
    %v654 = vunpack.c.l.b16 %v146
    %v655 = vunpack.c.h.b16 %v146
    %v656 = vunpack.c.l.b16 %v147
    %v657 = vunpack.c.h.b16 %v147
    %v658 = vunpack.c.l.b16 %v148
    %v659 = vunpack.c.h.b16 %v148
    %v660 = vunpack.c.l.b16 %v149
    %v661 = vunpack.c.h.b16 %v149
    %v662 = vunpack.c.l.b16 %v150
    %v663 = vunpack.c.h.b16 %v150
    %v664 = vunpack.c.l.b16 %v151
    %v665 = vunpack.c.h.b16 %v151
    %v666 = vunpack.c.l.b16 %v152
    %v667 = vunpack.c.h.b16 %v152
    %v668 = vunpack.c.l.b16 %v153
    %v669 = vunpack.c.h.b16 %v153
    %v670 = vunpack.c.l.b16 %v154
    %v671 = vunpack.c.h.b16 %v154
    %v672 = vunpack.c.l.b16 %v155
    %v673 = vunpack.c.h.b16 %v155
    %v674 = vunpack.c.l.b16 %v156
    %v675 = vunpack.c.h.b16 %v156
    %v676 = vunpack.c.l.b16 %v157
    %v677 = vunpack.c.h.b16 %v157
    %v678 = vunpack.c.l.b16 %v158
    %v679 = vunpack.c.h.b16 %v158
    %v680 = vunpack.c.l.b16 %v159
    %v681 = vunpack.c.h.b16 %v159
    %v682 = vunpack.c.l.b16 %v160
    %v683 = vunpack.c.h.b16 %v160
    %v684 = vunpack.c.l.b16 %v161
    %v685 = vunpack.c.h.b16 %v161
    %v686 = vunpack.c.l.b16 %v162
    %v687 = vunpack.c.h.b16 %v162
    %v688 = vunpack.c.l.b16 %v163
    %v689 = vunpack.c.h.b16 %v163
    %v690 = vunpack.c.l.b16 %v164
    %v691 = vunpack.c.h.b16 %v164
    %v692 = vunpack.c.l.b16 %v165
    %v693 = vunpack.c.h.b16 %v165
    %v694 = vunpack.c.l.b16 %v166
    %v695 = vunpack.c.h.b16 %v166
    %v696 = vunpack.c.l.b16 %v167
    %v697 = vunpack.c.h.b16 %v167
    %v698 = vunpack.c.l.b16 %v168
    %v699 = vunpack.c.h.b16 %v168
    %v700 = vunpack.c.l.b16 %v169
    %v701 = vunpack.c.h.b16 %v169
    %v702 = vunpack.c.l.b16 %v170
    %v703 = vunpack.c.h.b16 %v170
    %v704 = vunpack.c.l.b16 %v171
    %v705 = vunpack.c.h.b16 %v171
    %v706 = vunpack.c.l.b16 %v172
    %v707 = vunpack.c.h.b16 %v172
    %v708 = vunpack.c.l.b16 %v173
    %v709 = vunpack.c.h.b16 %v173
    %v710 = vunpack.c.l.b16 %v174
    %v711 = vunpack.c.h.b16 %v174
    %v712 = vunpack.c.l.b16 %v175
    %v713 = vunpack.c.h.b16 %v175
    %v714 = vunpack.c.l.b16 %v176
    %v715 = vunpack.c.h.b16 %v176
    %v716 = vunpack.c.l.b16 %v177
    %v717 = vunpack.c.h.b16 %v177
    %v718 = vunpack.c.l.b16 %v178
    %v719 = vunpack.c.h.b16 %v178
    %v720 = vunpack.c.l.b16 %v179
    %v721 = vunpack.c.h.b16 %v179
    %v722 = vunpack.c.l.b16 %v180
    %v723 = vunpack.c.h.b16 %v180
    %v724 = vunpack.c.l.b16 %v181
    %v725 = vunpack.c.h.b16 %v181
    %v726 = vunpack.c.l.b16 %v182
    %v727 = vunpack.c.h.b16 %v182
    %v728 = vunpack.c.l.b16 %v183
    %v729 = vunpack.c.h.b16 %v183
    %v730 = vunpack.c.l.b16 %v184
    %v731 = vunpack.c.h.b16 %v184
    %v732 = vunpack.c.l.b16 %v185
    %v733 = vunpack.c.h.b16 %v185
    %v734 = vunpack.c.l.b16 %v186
    %v735 = vunpack.c.h.b16 %v186
    %v736 = vunpack.c.l.b16 %v187
    %v737 = vunpack.c.h.b16 %v187
    %v738 = vunpack.c.l.b16 %v188
    %v739 = vunpack.c.h.b16 %v188
    %v740 = vunpack.c.l.b16 %v189
    %v741 = vunpack.c.h.b16 %v189
    %v742 = vunpack.c.l.b16 %v190
    %v743 = vunpack.c.h.b16 %v190
    %v744 = vunpack.c.l.b16 %v191
    %v745 = vunpack.c.h.b16 %v191
    %v746 = vunpack.c.l.b16 %v192
    %v747 = vunpack.c.h.b16 %v192
    %v748 = vunpack.c.l.b16 %v193
    %v749 = vunpack.c.h.b16 %v193
    %v750 = vunpack.c.l.b16 %v194
    %v751 = vunpack.c.h.b16 %v194
    %v752 = vunpack.c.l.b16 %v195
    %v753 = vunpack.c.h.b16 %v195
    %v754 = vunpack.c.l.b16 %v196
    %v755 = vunpack.c.h.b16 %v196
    %v756 = vunpack.c.l.b16 %v197
    %v757 = vunpack.c.h.b16 %v197
    %v758 = vunpack.c.l.b16 %v198
    %v759 = vunpack.c.h.b16 %v198
    %v760 = vunpack.c.l.b16 %v199
    %v761 = vunpack.c.h.b16 %v199
    %v762 = vunpack.c.l.b16 %v200
    %v763 = vunpack.c.h.b16 %v200
    %v764 = vunpack.c.l.b16 %v201
    %v765 = vunpack.c.h.b16 %v201
    %v766 = vunpack.c.l.b16 %v202
    %v767 = vunpack.c.h.b16 %v202
    %v768 = vunpack.c.l.b16 %v203
    %v769 = vunpack.c.h.b16 %v203
    %v770 = vunpack.c.l.b16 %v204
    %v771 = vunpack.c.h.b16 %v204
    %v772 = vunpack.c.l.b16 %v205
    %v773 = vunpack.c.h.b16 %v205
    %v774 = vunpack.c.l.b16 %v206
    %v775 = vunpack.c.h.b16 %v206
    %v776 = vunpack.c.l.b16 %v207
    %v777 = vunpack.c.h.b16 %v207
    %v778 = vunpack.c.l.b16 %v208
    %v779 = vunpack.c.h.b16 %v208
    %v780 = vunpack.c.l.b16 %v209
    %v781 = vunpack.c.h.b16 %v209
    %v782 = vunpack.c.l.b16 %v210
    %v783 = vunpack.c.h.b16 %v210
    %v784 = vunpack.c.l.b16 %v211
    %v785 = vunpack.c.h.b16 %v211
    %v786 = vunpack.c.l.b16 %v212
    %v787 = vunpack.c.h.b16 %v212
    %v788 = vunpack.c.l.b16 %v213
    %v789 = vunpack.c.h.b16 %v213
    %v790 = vunpack.c.l.b16 %v214
    %v791 = vunpack.c.h.b16 %v214
    %v792 = vunpack.c.l.b16 %v215
    %v793 = vunpack.c.h.b16 %v215
    %v794 = vunpack.c.l.b16 %v216
    %v795 = vunpack.c.h.b16 %v216
    %v796 = vunpack.c.l.b16 %v217
    %v797 = vunpack.c.h.b16 %v217
    %v798 = vunpack.c.l.b16 %v218
    %v799 = vunpack.c.h.b16 %v218
    %v800 = vunpack.c.l.b16 %v219
    %v801 = vunpack.c.h.b16 %v219
    %v802 = vunpack.c.l.b16 %v220
    %v803 = vunpack.c.h.b16 %v220
    %v804 = vunpack.c.l.b16 %v221
    %v805 = vunpack.c.h.b16 %v221
    %v806 = vunpack.c.l.b16 %v222
    %v807 = vunpack.c.h.b16 %v222
    %v808 = vunpack.c.l.b16 %v223
    %v809 = vunpack.c.h.b16 %v223
    %v810 = vunpack.c.l.b16 %v224
    %v811 = vunpack.c.h.b16 %v224
    %v812 = vunpack.c.l.b16 %v225
    %v813 = vunpack.c.h.b16 %v225
    %v814 = vunpack.c.l.b16 %v226
    %v815 = vunpack.c.h.b16 %v226
    %v816 = vunpack.c.l.b16 %v227
    %v817 = vunpack.c.h.b16 %v227
    %v818 = vunpack.c.l.b16 %v228
    %v819 = vunpack.c.h.b16 %v228
    %v820 = vunpack.c.l.b16 %v229
    %v821 = vunpack.c.h.b16 %v229
    %v822 = vunpack.c.l.b16 %v230
    %v823 = vunpack.c.h.b16 %v230
    %v824 = vunpack.c.l.b16 %v231
    %v825 = vunpack.c.h.b16 %v231
    %v826 = vunpack.c.l.b16 %v232
    %v827 = vunpack.c.h.b16 %v232
    %v828 = vunpack.c.l.b16 %v233
    %v829 = vunpack.c.h.b16 %v233
    %v830 = vunpack.c.l.b16 %v234
    %v831 = vunpack.c.h.b16 %v234
    %v832 = vunpack.c.l.b16 %v235
    %v833 = vunpack.c.h.b16 %v235
    %v834 = vunpack.c.l.b16 %v236
    %v835 = vunpack.c.h.b16 %v236
    %v836 = vunpack.c.l.b16 %v237
    %v837 = vunpack.c.h.b16 %v237
    %v838 = vunpack.c.l.b16 %v238
    %v839 = vunpack.c.h.b16 %v238
    %v840 = vunpack.c.l.b16 %v239
    %v841 = vunpack.c.h.b16 %v239
    %v842 = vunpack.c.l.b16 %v240
    %v843 = vunpack.c.h.b16 %v240
    %v844 = vunpack.c.l.b16 %v241
    %v845 = vunpack.c.h.b16 %v241
    %v846 = vunpack.c.l.b16 %v242
    %v847 = vunpack.c.h.b16 %v242
    %v848 = vunpack.c.l.b16 %v243
    %v849 = vunpack.c.h.b16 %v243
    %v850 = vunpack.c.l.b16 %v244
    %v851 = vunpack.c.h.b16 %v244
    %v852 = vunpack.c.l.b16 %v245
    %v853 = vunpack.c.h.b16 %v245
    %v854 = vunpack.c.l.b16 %v246
    %v855 = vunpack.c.h.b16 %v246
    %v856 = vunpack.c.l.b16 %v247
    %v857 = vunpack.c.h.b16 %v247
    %v858 = vunpack.c.l.b16 %v248
    %v859 = vunpack.c.h.b16 %v248
    %v860 = vunpack.c.l.b16 %v249
    %v861 = vunpack.c.h.b16 %v249
    %v862 = vunpack.c.l.b16 %v250
    %v863 = vunpack.c.h.b16 %v250
    %v864 = vunpack.c.l.b16 %v251
    %v865 = vunpack.c.h.b16 %v251
    %v866 = vunpack.c.l.b16 %v252
    %v867 = vunpack.c.h.b16 %v252
    %v868 = vunpack.c.l.b16 %v253
    %v869 = vunpack.c.h.b16 %v253
    %v870 = vunpack.c.l.b16 %v254
    %v871 = vunpack.c.h.b16 %v254
    %v872 = vunpack.c.l.b16 %v255
    %v873 = vunpack.c.h.b16 %v255
    %v874 = vunpack.c.l.b16 %v256
    %v875 = vunpack.c.h.b16 %v256
    %v876 = vunpack.c.l.b16 %v257
    %v877 = vunpack.c.h.b16 %v257
    %v878 = vunpack.c.l.b16 %v258
    %v879 = vunpack.c.h.b16 %v258
    %v880 = vunpack.c.l.b16 %v259
    %v881 = vunpack.c.h.b16 %v259
    %v882 = vunpack.c.l.b16 %v260
    %v883 = vunpack.c.h.b16 %v260
    %v884 = vunpack.c.l.b16 %v261
    %v885 = vunpack.c.h.b16 %v261
    %v886 = vunpack.c.l.b16 %v262
    %v887 = vunpack.c.h.b16 %v262
    %v888 = vunpack.c.l.b16 %v263
    %v889 = vunpack.c.h.b16 %v263
    %v890 = vunpack.c.l.b16 %v264
    %v891 = vunpack.c.h.b16 %v264
    %v892 = vunpack.c.l.b16 %v265
    %v893 = vunpack.c.h.b16 %v265
    %v894 = vunpack.c.l.b16 %v266
    %v895 = vunpack.c.h.b16 %v266
    %v896 = vunpack.c.l.b16 %v267
    %v897 = vunpack.c.h.b16 %v267
    %v898 = vunpack.c.l.b16 %v268
    %v899 = vunpack.c.h.b16 %v268
    %v900 = vunpack.c.l.b16 %v269
    %v901 = vunpack.c.h.b16 %v269
    %v902 = vunpack.c.l.b16 %v270
    %v903 = vunpack.c.h.b16 %v270
    %v904 = vunpack.c.l.b16 %v271
    %v905 = vunpack.c.h.b16 %v271
    %v906 = vunpack.c.l.b16 %v272
    %v907 = vunpack.c.h.b16 %v272
    %v908 = vunpack.c.l.b16 %v273
    %v909 = vunpack.c.h.b16 %v273
    %v910 = vunpack.c.l.b16 %v274
    %v911 = vunpack.c.h.b16 %v274
    %v912 = vunpack.c.l.b16 %v275
    %v913 = vunpack.c.h.b16 %v275
    %v914 = vunpack.c.l.b16 %v276
    %v915 = vunpack.c.h.b16 %v276
    %v916 = vunpack.c.l.b16 %v277
    %v917 = vunpack.c.h.b16 %v277
    %v918 = vunpack.c.l.b16 %v278
    %v919 = vunpack.c.h.b16 %v278
    %v920 = vunpack.c.l.b16 %v279
    %v921 = vunpack.c.h.b16 %v279
    %v922 = vunpack.c.l.b16 %v280
    %v923 = vunpack.c.h.b16 %v280
    %v924 = vunpack.c.l.b16 %v281
    %v925 = vunpack.c.h.b16 %v281
    %v926 = vunpack.c.l.b16 %v282
    %v927 = vunpack.c.h.b16 %v282
    %v928 = vunpack.c.l.b16 %v283
    %v929 = vunpack.c.h.b16 %v283
    %v930 = vunpack.c.l.b16 %v284
    %v931 = vunpack.c.h.b16 %v284
    %v932 = vunpack.c.l.b16 %v285
    %v933 = vunpack.c.h.b16 %v285
    %v934 = vunpack.c.l.b16 %v286
    %v935 = vunpack.c.h.b16 %v286
    %v936 = vunpack.c.l.b16 %v287
    %v937 = vunpack.c.h.b16 %v287
    %v938 = vunpack.c.l.b16 %v288
    %v939 = vunpack.c.h.b16 %v288
    %v940 = vunpack.c.l.b16 %v289
    %v941 = vunpack.c.h.b16 %v289
    %v942 = vunpack.c.l.b16 %v290
    %v943 = vunpack.c.h.b16 %v290
    %v944 = vunpack.c.l.b16 %v291
    %v945 = vunpack.c.h.b16 %v291
    %v946 = vunpack.c.l.b16 %v292
    %v947 = vunpack.c.h.b16 %v292
    %v948 = vunpack.c.l.b16 %v293
    %v949 = vunpack.c.h.b16 %v293
    %v950 = vunpack.c.l.b16 %v294
    %v951 = vunpack.c.h.b16 %v294
    %v952 = vunpack.c.l.b16 %v295
    %v953 = vunpack.c.h.b16 %v295
    %v954 = vunpack.c.l.b16 %v296
    %v955 = vunpack.c.h.b16 %v296
    %v956 = vunpack.c.l.b16 %v297
    %v957 = vunpack.c.h.b16 %v297
    %v958 = vunpack.c.l.b16 %v298
    %v959 = vunpack.c.h.b16 %v298
    %v960 = vunpack.c.l.b16 %v299
    %v961 = vunpack.c.h.b16 %v299
    %v962 = vunpack.c.l.b16 %v300
    %v963 = vunpack.c.h.b16 %v300
    %v964 = vunpack.c.l.b16 %v301
    %v965 = vunpack.c.h.b16 %v301
    %v966 = vunpack.c.l.b16 %v302
    %v967 = vunpack.c.h.b16 %v302
    %v968 = vunpack.c.l.b16 %v303
    %v969 = vunpack.c.h.b16 %v303
    %v970 = vunpack.c.l.b16 %v304
    %v971 = vunpack.c.h.b16 %v304
    %v972 = vunpack.c.l.b16 %v305
    %v973 = vunpack.c.h.b16 %v305
    %v974 = vunpack.c.l.b16 %v306
    %v975 = vunpack.c.h.b16 %v306
    %v976 = vunpack.c.l.b16 %v307
    %v977 = vunpack.c.h.b16 %v307
    %v978 = vunpack.c.l.b16 %v308
    %v979 = vunpack.c.h.b16 %v308
    %v980 = vunpack.c.l.b16 %v309
    %v981 = vunpack.c.h.b16 %v309
    %v982 = vunpack.c.l.b16 %v310
    %v983 = vunpack.c.h.b16 %v310
    %v984 = vunpack.c.l.b16 %v311
    %v985 = vunpack.c.h.b16 %v311
    %v986 = vunpack.c.l.b16 %v312
    %v987 = vunpack.c.h.b16 %v312
    %v988 = vunpack.c.l.b16 %v313
    %v989 = vunpack.c.h.b16 %v313
    %v990 = vunpack.c.l.b16 %v314
    %v991 = vunpack.c.h.b16 %v314
    %v992 = vunpack.c.l.b16 %v315
    %v993 = vunpack.c.h.b16 %v315
    %v994 = vunpack.c.l.b16 %v316
    %v995 = vunpack.c.h.b16 %v316
    %v996 = vunpack.c.l.b16 %v317
    %v997 = vunpack.c.h.b16 %v317
    %v998 = vunpack.c.l.b16 %v318
    %v999 = vunpack.c.h.b16 %v318
    %v1000 = vunpack.c.l.b16 %v319
    %v1001 = vunpack.c.h.b16 %v319
    %v1002 = vunpack.c.l.b16 %v320
    %v1003 = vunpack.c.h.b16 %v320
    %v1004 = vunpack.c.l.b16 %v321
    %v1005 = vunpack.c.h.b16 %v321
    %v1006 = vunpack.c.l.b16 %v322
    %v1007 = vunpack.c.h.b16 %v322
    %v1008 = vunpack.c.l.b16 %v323
    %v1009 = vunpack.c.h.b16 %v323
    %v1010 = vunpack.c.l.b16 %v324
    %v1011 = vunpack.c.h.b16 %v324
    %v1012 = vunpack.c.l.b16 %v325
    %v1013 = vunpack.c.h.b16 %v325
    %v1014 = vunpack.c.l.b16 %v326
    %v1015 = vunpack.c.h.b16 %v326
    %v1016 = vunpack.c.l.b16 %v327
    %v1017 = vunpack.c.h.b16 %v327
    %v1018 = vunpack.c.l.b16 %v328
    %v1019 = vunpack.c.h.b16 %v328
    %v1020 = vunpack.c.l.b16 %v329
    %v1021 = vunpack.c.h.b16 %v329
    %v1022 = vunpack.c.l.b16 %v330
    %v1023 = vunpack.c.h.b16 %v330
    %v1024 = vunpack.c.l.b16 %v331
    %v1025 = vunpack.c.h.b16 %v331
    %v1026 = vunpack.c.l.b16 %v332
    %v1027 = vunpack.c.h.b16 %v332
    %v1028 = vunpack.c.l.b16 %v333
    %v1029 = vunpack.c.h.b16 %v333
    %v1030 = vunpack.c.l.b16 %v334
    %v1031 = vunpack.c.h.b16 %v334
    %v1032 = vunpack.c.l.b16 %v335
    %v1033 = vunpack.c.h.b16 %v335
    %v1034 = vunpack.c.l.b16 %v336
    %v1035 = vunpack.c.h.b16 %v336
    %v1036 = vunpack.c.l.b16 %v337
    %v1037 = vunpack.c.h.b16 %v337
    %v1038 = vunpack.c.l.b16 %v338
    %v1039 = vunpack.c.h.b16 %v338
    %v1040 = vunpack.c.l.b16 %v339
    %v1041 = vunpack.c.h.b16 %v339
    %v1042 = vunpack.c.l.b16 %v340
    %v1043 = vunpack.c.h.b16 %v340
    %v1044 = vunpack.c.l.b16 %v341
    %v1045 = vunpack.c.h.b16 %v341
    %v1046 = vunpack.c.l.b16 %v342
    %v1047 = vunpack.c.h.b16 %v342
    %v1048 = vunpack.c.l.b16 %v343
    %v1049 = vunpack.c.h.b16 %v343
    %v1050 = vunpack.c.l.b16 %v344
    %v1051 = vunpack.c.h.b16 %v344
    %v1052 = vunpack.c.l.b16 %v345
    %v1053 = vunpack.c.h.b16 %v345
    %v1054 = vunpack.c.l.b16 %v346
    %v1055 = vunpack.c.h.b16 %v346
    %v1056 = vunpack.c.l.b16 %v347
    %v1057 = vunpack.c.h.b16 %v347
    %v1058 = vunpack.c.l.b16 %v348
    %v1059 = vunpack.c.h.b16 %v348
    %v1060 = vunpack.c.l.b16 %v349
    %v1061 = vunpack.c.h.b16 %v349
    %v1062 = vunpack.c.l.b16 %v350
    %v1063 = vunpack.c.h.b16 %v350
    %v1064 = vunpack.c.l.b16 %v351
    %v1065 = vunpack.c.h.b16 %v351
    %v1066 = vunpack.c.l.b16 %v352
    %v1067 = vunpack.c.h.b16 %v352
    %v1068 = vunpack.c.l.b16 %v353
    %v1069 = vunpack.c.h.b16 %v353
    %v1070 = vunpack.c.l.b16 %v354
    %v1071 = vunpack.c.h.b16 %v354
    %v1072 = vunpack.c.l.b16 %v355
    %v1073 = vunpack.c.h.b16 %v355
    %v1074 = vunpack.c.l.b16 %v356
    %v1075 = vunpack.c.h.b16 %v356
    %v1076 = vunpack.c.l.b16 %v357
    %v1077 = vunpack.c.h.b16 %v357
    %v1078 = vunpack.c.l.b16 %v358
    %v1079 = vunpack.c.h.b16 %v358
    %v1080 = vunpack.c.l.b16 %v359
    %v1081 = vunpack.c.h.b16 %v359
    %v1082 = vunpack.c.l.b16 %v360
    %v1083 = vunpack.c.h.b16 %v360
    %v1084 = vunpack.c.l.b16 %v361
    %v1085 = vunpack.c.h.b16 %v361
    %v1086 = vunpack.c.l.b16 %v362
    %v1087 = vunpack.c.h.b16 %v362
    %v1088 = vunpack.c.l.b16 %v363
    %v1089 = vunpack.c.h.b16 %v363
    %v1090 = vunpack.c.l.b16 %v364
    %v1091 = vunpack.c.h.b16 %v364
    %v1092 = vunpack.c.l.b16 %v365
    %v1093 = vunpack.c.h.b16 %v365
    %v1094 = vunpack.c.l.b16 %v366
    %v1095 = vunpack.c.h.b16 %v366
    %v1096 = vunpack.c.l.b16 %v367
    %v1097 = vunpack.c.h.b16 %v367
    %v1098 = vpack.c.b16 %v622, %v618
    %v1099 = vpack.c.b16 %v623, %v619
    %v1100 = vpack.c.b16 %v624, %v620
    %v1101 = vpack.c.b16 %v625, %v621
    %v1102 = vpack.c.b16 %v630, %v626
    %v1103 = vpack.c.b16 %v631, %v627
    %v1104 = vpack.c.b16 %v632, %v628
    %v1105 = vpack.c.b16 %v633, %v629
    %v1106 = vpack.c.b16 %v638, %v634
    %v1107 = vpack.c.b16 %v639, %v635
    %v1108 = vpack.c.b16 %v640, %v636
    %v1109 = vpack.c.b16 %v641, %v637
    %v1110 = vpack.c.b16 %v646, %v642
    %v1111 = vpack.c.b16 %v647, %v643
    %v1112 = vpack.c.b16 %v648, %v644
    %v1113 = vpack.c.b16 %v649, %v645
    %v1114 = vpack.c.b16 %v654, %v650
    %v1115 = vpack.c.b16 %v655, %v651
    %v1116 = vpack.c.b16 %v656, %v652
    %v1117 = vpack.c.b16 %v657, %v653
    %v1118 = vpack.c.b16 %v662, %v658
    %v1119 = vpack.c.b16 %v663, %v659
    %v1120 = vpack.c.b16 %v664, %v660
    %v1121 = vpack.c.b16 %v665, %v661
    %v1122 = vpack.c.b16 %v670, %v666
    %v1123 = vpack.c.b16 %v671, %v667
    %v1124 = vpack.c.b16 %v672, %v668
    %v1125 = vpack.c.b16 %v673, %v669
    %v1126 = vpack.c.b16 %v678, %v674
    %v1127 = vpack.c.b16 %v679, %v675
    %v1128 = vpack.c.b16 %v680, %v676
    %v1129 = vpack.c.b16 %v681, %v677
    %v1130 = vpack.c.b16 %v686, %v682
    %v1131 = vpack.c.b16 %v687, %v683
    %v1132 = vpack.c.b16 %v688, %v684
    %v1133 = vpack.c.b16 %v689, %v685
    %v1134 = vpack.c.b16 %v694, %v690
    %v1135 = vpack.c.b16 %v695, %v691
    %v1136 = vpack.c.b16 %v696, %v692
    %v1137 = vpack.c.b16 %v697, %v693
    %v1138 = vpack.c.b16 %v702, %v698
    %v1139 = vpack.c.b16 %v703, %v699
    %v1140 = vpack.c.b16 %v704, %v700
    %v1141 = vpack.c.b16 %v705, %v701
    %v1142 = vpack.c.b16 %v710, %v706
    %v1143 = vpack.c.b16 %v711, %v707
    %v1144 = vpack.c.b16 %v712, %v708
    %v1145 = vpack.c.b16 %v713, %v709
    %v1146 = vpack.c.b16 %v718, %v714
    %v1147 = vpack.c.b16 %v719, %v715
    %v1148 = vpack.c.b16 %v720, %v716
    %v1149 = vpack.c.b16 %v721, %v717
    %v1150 = vpack.c.b16 %v726, %v722
    %v1151 = vpack.c.b16 %v727, %v723
    %v1152 = vpack.c.b16 %v728, %v724
    %v1153 = vpack.c.b16 %v729, %v725
    %v1154 = vpack.c.b16 %v734, %v730
    %v1155 = vpack.c.b16 %v735, %v731
    %v1156 = vpack.c.b16 %v736, %v732
    %v1157 = vpack.c.b16 %v737, %v733
    %v1158 = vpack.c.b16 %v742, %v738
    %v1159 = vpack.c.b16 %v743, %v739
    %v1160 = vpack.c.b16 %v744, %v740
    %v1161 = vpack.c.b16 %v745, %v741
    %v1162 = vpack.c.b16 %v750, %v746
    %v1163 = vpack.c.b16 %v751, %v747
    %v1164 = vpack.c.b16 %v752, %v748
    %v1165 = vpack.c.b16 %v753, %v749
    %v1166 = vpack.c.b16 %v758, %v754
    %v1167 = vpack.c.b16 %v759, %v755
    %v1168 = vpack.c.b16 %v760, %v756
    %v1169 = vpack.c.b16 %v761, %v757
    %v1170 = vpack.c.b16 %v766, %v762
    %v1171 = vpack.c.b16 %v767, %v763
    %v1172 = vpack.c.b16 %v768, %v764
    %v1173 = vpack.c.b16 %v769, %v765
    %v1174 = vpack.c.b16 %v774, %v770
    %v1175 = vpack.c.b16 %v775, %v771
    %v1176 = vpack.c.b16 %v776, %v772
    %v1177 = vpack.c.b16 %v777, %v773
    %v1178 = vpack.c.b16 %v782, %v778
    %v1179 = vpack.c.b16 %v783, %v779
    %v1180 = vpack.c.b16 %v784, %v780
    %v1181 = vpack.c.b16 %v785, %v781
    %v1182 = vpack.c.b16 %v790, %v786
    %v1183 = vpack.c.b16 %v791, %v787
    %v1184 = vpack.c.b16 %v792, %v788
    %v1185 = vpack.c.b16 %v793, %v789
    %v1186 = vpack.c.b16 %v798, %v794
    %v1187 = vpack.c.b16 %v799, %v795
    %v1188 = vpack.c.b16 %v800, %v796
    %v1189 = vpack.c.b16 %v801, %v797
    %v1190 = vpack.c.b16 %v806, %v802
    %v1191 = vpack.c.b16 %v807, %v803
    %v1192 = vpack.c.b16 %v808, %v804
    %v1193 = vpack.c.b16 %v809, %v805
    %v1194 = vpack.c.b16 %v814, %v810
    %v1195 = vpack.c.b16 %v815, %v811
    %v1196 = vpack.c.b16 %v816, %v812
    %v1197 = vpack.c.b16 %v817, %v813
    %v1198 = vpack.c.b16 %v822, %v818
    %v1199 = vpack.c.b16 %v823, %v819
    %v1200 = vpack.c.b16 %v824, %v820
    %v1201 = vpack.c.b16 %v825, %v821
    %v1202 = vpack.c.b16 %v830, %v826
    %v1203 = vpack.c.b16 %v831, %v827
    %v1204 = vpack.c.b16 %v832, %v828
    %v1205 = vpack.c.b16 %v833, %v829
    %v1206 = vpack.c.b16 %v838, %v834
    %v1207 = vpack.c.b16 %v839, %v835
    %v1208 = vpack.c.b16 %v840, %v836
    %v1209 = vpack.c.b16 %v841, %v837
    %v1210 = vpack.c.b16 %v846, %v842
    %v1211 = vpack.c.b16 %v847, %v843
    %v1212 = vpack.c.b16 %v848, %v844
    %v1213 = vpack.c.b16 %v849, %v845
    %v1214 = vpack.c.b16 %v854, %v850
    %v1215 = vpack.c.b16 %v855, %v851
    %v1216 = vpack.c.b16 %v856, %v852
    %v1217 = vpack.c.b16 %v857, %v853
    %v1218 = vpack.c.b16 %v862, %v858
    %v1219 = vpack.c.b16 %v863, %v859
    %v1220 = vpack.c.b16 %v864, %v860
    %v1221 = vpack.c.b16 %v865, %v861
    %v1222 = vpack.c.b16 %v870, %v866
    %v1223 = vpack.c.b16 %v871, %v867
    %v1224 = vpack.c.b16 %v872, %v868
    %v1225 = vpack.c.b16 %v873, %v869
    %v1226 = vpack.c.b16 %v878, %v874
    %v1227 = vpack.c.b16 %v879, %v875
    %v1228 = vpack.c.b16 %v880, %v876
    %v1229 = vpack.c.b16 %v881, %v877
    %v1230 = vpack.c.b16 %v886, %v882
    %v1231 = vpack.c.b16 %v887, %v883
    %v1232 = vpack.c.b16 %v888, %v884
    %v1233 = vpack.c.b16 %v889, %v885
    %v1234 = vpack.c.b16 %v894, %v890
    %v1235 = vpack.c.b16 %v895, %v891
    %v1236 = vpack.c.b16 %v896, %v892
    %v1237 = vpack.c.b16 %v897, %v893
    %v1238 = vpack.c.b16 %v902, %v898
    %v1239 = vpack.c.b16 %v903, %v899
    %v1240 = vpack.c.b16 %v904, %v900
    %v1241 = vpack.c.b16 %v905, %v901
    %v1242 = vpack.c.b16 %v910, %v906
    %v1243 = vpack.c.b16 %v911, %v907
    %v1244 = vpack.c.b16 %v912, %v908
    %v1245 = vpack.c.b16 %v913, %v909
    %v1246 = vpack.c.b16 %v918, %v914
    %v1247 = vpack.c.b16 %v919, %v915
    %v1248 = vpack.c.b16 %v920, %v916
    %v1249 = vpack.c.b16 %v921, %v917
    %v1250 = vpack.c.b16 %v926, %v922
    %v1251 = vpack.c.b16 %v927, %v923
    %v1252 = vpack.c.b16 %v928, %v924
    %v1253 = vpack.c.b16 %v929, %v925
    %v1254 = vpack.c.b16 %v934, %v930
    %v1255 = vpack.c.b16 %v935, %v931
    %v1256 = vpack.c.b16 %v936, %v932
    %v1257 = vpack.c.b16 %v937, %v933
    %v1258 = vpack.c.b16 %v942, %v938
    %v1259 = vpack.c.b16 %v943, %v939
    %v1260 = vpack.c.b16 %v944, %v940
    %v1261 = vpack.c.b16 %v945, %v941
    %v1262 = vpack.c.b16 %v950, %v946
    %v1263 = vpack.c.b16 %v951, %v947
    %v1264 = vpack.c.b16 %v952, %v948
    %v1265 = vpack.c.b16 %v953, %v949
    %v1266 = vpack.c.b16 %v958, %v954
    %v1267 = vpack.c.b16 %v959, %v955
    %v1268 = vpack.c.b16 %v960, %v956
    %v1269 = vpack.c.b16 %v961, %v957
    %v1270 = vpack.c.b16 %v966, %v962
    %v1271 = vpack.c.b16 %v967, %v963
    %v1272 = vpack.c.b16 %v968, %v964
    %v1273 = vpack.c.b16 %v969, %v965
    %v1274 = vpack.c.b16 %v974, %v970
    %v1275 = vpack.c.b16 %v975, %v971
    %v1276 = vpack.c.b16 %v976, %v972
    %v1277 = vpack.c.b16 %v977, %v973
    %v1278 = vpack.c.b16 %v982, %v978
    %v1279 = vpack.c.b16 %v983, %v979
    %v1280 = vpack.c.b16 %v984, %v980
    %v1281 = vpack.c.b16 %v985, %v981
    %v1282 = vpack.c.b16 %v990, %v986
    %v1283 = vpack.c.b16 %v991, %v987
    %v1284 = vpack.c.b16 %v992, %v988
    %v1285 = vpack.c.b16 %v993, %v989
    %v1286 = vpack.c.b16 %v998, %v994
    %v1287 = vpack.c.b16 %v999, %v995
    %v1288 = vpack.c.b16 %v1000, %v996
    %v1289 = vpack.c.b16 %v1001, %v997
    %v1290 = vpack.c.b16 %v1006, %v1002
    %v1291 = vpack.c.b16 %v1007, %v1003
    %v1292 = vpack.c.b16 %v1008, %v1004
    %v1293 = vpack.c.b16 %v1009, %v1005
    %v1294 = vpack.c.b16 %v1014, %v1010
    %v1295 = vpack.c.b16 %v1015, %v1011
    %v1296 = vpack.c.b16 %v1016, %v1012
    %v1297 = vpack.c.b16 %v1017, %v1013
    %v1298 = vpack.c.b16 %v1022, %v1018
    %v1299 = vpack.c.b16 %v1023, %v1019
    %v1300 = vpack.c.b16 %v1024, %v1020
    %v1301 = vpack.c.b16 %v1025, %v1021
    %v1302 = vpack.c.b16 %v1030, %v1026
    %v1303 = vpack.c.b16 %v1031, %v1027
    %v1304 = vpack.c.b16 %v1032, %v1028
    %v1305 = vpack.c.b16 %v1033, %v1029
    %v1306 = vpack.c.b16 %v1038, %v1034
    %v1307 = vpack.c.b16 %v1039, %v1035
    %v1308 = vpack.c.b16 %v1040, %v1036
    %v1309 = vpack.c.b16 %v1041, %v1037
    %v1310 = vpack.c.b16 %v1046, %v1042
    %v1311 = vpack.c.b16 %v1047, %v1043
    %v1312 = vpack.c.b16 %v1048, %v1044
    %v1313 = vpack.c.b16 %v1049, %v1045
    %v1314 = vpack.c.b16 %v1054, %v1050
    %v1315 = vpack.c.b16 %v1055, %v1051
    %v1316 = vpack.c.b16 %v1056, %v1052
    %v1317 = vpack.c.b16 %v1057, %v1053
    %v1318 = vpack.c.b16 %v1062, %v1058
    %v1319 = vpack.c.b16 %v1063, %v1059
    %v1320 = vpack.c.b16 %v1064, %v1060
    %v1321 = vpack.c.b16 %v1065, %v1061
    %v1322 = vpack.c.b16 %v1070, %v1066
    %v1323 = vpack.c.b16 %v1071, %v1067
    %v1324 = vpack.c.b16 %v1072, %v1068
    %v1325 = vpack.c.b16 %v1073, %v1069
    %v1326 = vpack.c.b16 %v1078, %v1074
    %v1327 = vpack.c.b16 %v1079, %v1075
    %v1328 = vpack.c.b16 %v1080, %v1076
    %v1329 = vpack.c.b16 %v1081, %v1077
    %v1330 = vpack.c.b16 %v1086, %v1082
    %v1331 = vpack.c.b16 %v1087, %v1083
    %v1332 = vpack.c.b16 %v1088, %v1084
    %v1333 = vpack.c.b16 %v1089, %v1085
    %v1334 = vpack.c.b16 %v1094, %v1090
    %v1335 = vpack.c.b16 %v1095, %v1091
    %v1336 = vpack.c.b16 %v1096, %v1092
    %v1337 = vpack.c.b16 %v1097, %v1093
    %vm1578 = vcmask 523264
    %v1580 = vsel %vm1578, %v127, 0
    %1582 = vmatpush.bf16.msra.mxu0 %v1126
    %1583 = vmatpush.bf16.msra.mxu0 %v1122
    %1584 = vmatpush.bf16.msra.mxu0 %v1118
    %1585 = vmatpush.bf16.msra.mxu0 %v1114
    %1586 = vmatpush.bf16.msra.mxu0 %v1110
    %1587 = vmatpush.bf16.msra.mxu0 %v1106
    %1588 = vmatpush.bf16.msra.mxu0 %v1102
    %1589 = vmatpush.bf16.msra.mxu0 %v1098
    %1590 = vmatmul.bf16.gmra.mxu0 %v120
    %v1591 = vpop.f32.mrf.mxu0
    %v1592 = vadd.f32 %v370, %v1591
    %v1593 = vpop.f32.mrf.mxu0
    %v1594 = vadd.f32 %v370, %v1593
    %1595 = vdwg.mxu0
    %1596 = vmatpush.bf16.msra.mxu0 %v1158
    %1597 = vmatpush.bf16.msra.mxu0 %v1154
    %1598 = vmatpush.bf16.msra.mxu0 %v1150
    %1599 = vmatpush.bf16.msra.mxu0 %v1146
    %1600 = vmatpush.bf16.msra.mxu0 %v1142
    %1601 = vmatpush.bf16.msra.mxu0 %v1138
    %1602 = vmatpush.bf16.msra.mxu0 %v1134
    %1603 = vmatpush.bf16.msra.mxu0 %v1130
    %1604 = vmatmul.bf16.gmra.mxu0 %v121
    %v1605 = vpop.f32.mrf.mxu0
    %v1606 = vadd.f32 %v1592, %v1605
    %v1607 = vpop.f32.mrf.mxu0
    %v1608 = vadd.f32 %v1594, %v1607
    %1609 = vdwg.mxu0
    %1610 = vmatpush.bf16.msra.mxu0 %v1190
    %1611 = vmatpush.bf16.msra.mxu0 %v1186
    %1612 = vmatpush.bf16.msra.mxu0 %v1182
    %1613 = vmatpush.bf16.msra.mxu0 %v1178
    %1614 = vmatpush.bf16.msra.mxu0 %v1174
    %1615 = vmatpush.bf16.msra.mxu0 %v1170
    %1616 = vmatpush.bf16.msra.mxu0 %v1166
    %1617 = vmatpush.bf16.msra.mxu0 %v1162
    %1618 = vmatmul.bf16.gmra.mxu0 %v122
    %v1619 = vpop.f32.mrf.mxu0
    %v1620 = vadd.f32 %v1606, %v1619
    %v1621 = vpop.f32.mrf.mxu0
    %v1622 = vadd.f32 %v1608, %v1621
    %1623 = vdwg.mxu0
    %1624 = vmatpush.bf16.msra.mxu0 %v1222
    %1625 = vmatpush.bf16.msra.mxu0 %v1218
    %1626 = vmatpush.bf16.msra.mxu0 %v1214
    %1627 = vmatpush.bf16.msra.mxu0 %v1210
    %1628 = vmatpush.bf16.msra.mxu0 %v1206
    %1629 = vmatpush.bf16.msra.mxu0 %v1202
    %1630 = vmatpush.bf16.msra.mxu0 %v1198
    %1631 = vmatpush.bf16.msra.mxu0 %v1194
    %1632 = vmatmul.bf16.gmra.mxu0 %v123
    %v1633 = vpop.f32.mrf.mxu0
    %v1634 = vadd.f32 %v1620, %v1633
    %v1635 = vpop.f32.mrf.mxu0
    %v1636 = vadd.f32 %v1622, %v1635
    %1637 = vdwg.mxu0
    %1638 = vmatpush.bf16.msra.mxu0 %v1254
    %1639 = vmatpush.bf16.msra.mxu0 %v1250
    %1640 = vmatpush.bf16.msra.mxu0 %v1246
    %1641 = vmatpush.bf16.msra.mxu0 %v1242
    %1642 = vmatpush.bf16.msra.mxu0 %v1238
    %1643 = vmatpush.bf16.msra.mxu0 %v1234
    %1644 = vmatpush.bf16.msra.mxu0 %v1230
    %1645 = vmatpush.bf16.msra.mxu0 %v1226
    %1646 = vmatmul.bf16.gmra.mxu0 %v124
    %v1647 = vpop.f32.mrf.mxu0
    %v1648 = vadd.f32 %v1634, %v1647
    %v1649 = vpop.f32.mrf.mxu0
    %v1650 = vadd.f32 %v1636, %v1649
    %1651 = vdwg.mxu0
    %1652 = vmatpush.bf16.msra.mxu0 %v1286
    %1653 = vmatpush.bf16.msra.mxu0 %v1282
    %1654 = vmatpush.bf16.msra.mxu0 %v1278
    %1655 = vmatpush.bf16.msra.mxu0 %v1274
    %1656 = vmatpush.bf16.msra.mxu0 %v1270
    %1657 = vmatpush.bf16.msra.mxu0 %v1266
    %1658 = vmatpush.bf16.msra.mxu0 %v1262
    %1659 = vmatpush.bf16.msra.mxu0 %v1258
    %1660 = vmatmul.bf16.gmra.mxu0 %v125
    %v1661 = vpop.f32.mrf.mxu0
    %v1662 = vadd.f32 %v1648, %v1661
    %v1663 = vpop.f32.mrf.mxu0
    %v1664 = vadd.f32 %v1650, %v1663
    %1665 = vdwg.mxu0
    %1666 = vmatpush.bf16.msra.mxu0 %v1318
    %1667 = vmatpush.bf16.msra.mxu0 %v1314
    %1668 = vmatpush.bf16.msra.mxu0 %v1310
    %1669 = vmatpush.bf16.msra.mxu0 %v1306
    %1670 = vmatpush.bf16.msra.mxu0 %v1302
    %1671 = vmatpush.bf16.msra.mxu0 %v1298
    %1672 = vmatpush.bf16.msra.mxu0 %v1294
    %1673 = vmatpush.bf16.msra.mxu0 %v1290
    %1674 = vmatmul.bf16.gmra.mxu0 %v126
    %v1675 = vpop.f32.mrf.mxu0
    %v1676 = vadd.f32 %v1662, %v1675
    %v1677 = vpop.f32.mrf.mxu0
    %v1678 = vadd.f32 %v1664, %v1677
    %1679 = vdwg.mxu0
    %1680 = vmatpush.bf16.msra.mxu0 0
    %1681 = vmatpush.bf16.msra.mxu0 0
    %1682 = vmatpush.bf16.msra.mxu0 0
    %1683 = vmatpush.bf16.msra.mxu0 0
    %1684 = vmatpush.bf16.msra.mxu0 %v1334
    %1685 = vmatpush.bf16.msra.mxu0 %v1330
    %1686 = vmatpush.bf16.msra.mxu0 %v1326
    %1687 = vmatpush.bf16.msra.mxu0 %v1322
    %1688 = vmatmul.bf16.gmra.mxu0 %v1580
    %v1689 = vpop.f32.mrf.mxu0
    %v1690 = vadd.f32 %v1676, %v1689
    %v1691 = vpop.f32.mrf.mxu0
    %v1692 = vadd.f32 %v1678, %v1691
    %1693 = vdwg.mxu0
    %1694 = vmatpush.bf16.msra.mxu0 %v1127
    %1695 = vmatpush.bf16.msra.mxu0 %v1123
    %1696 = vmatpush.bf16.msra.mxu0 %v1119
    %1697 = vmatpush.bf16.msra.mxu0 %v1115
    %1698 = vmatpush.bf16.msra.mxu0 %v1111
    %1699 = vmatpush.bf16.msra.mxu0 %v1107
    %1700 = vmatpush.bf16.msra.mxu0 %v1103
    %1701 = vmatpush.bf16.msra.mxu0 %v1099
    %1702 = vmatmul.bf16.gmra.mxu0 %v120
    %v1703 = vpop.f32.mrf.mxu0
    %v1704 = vadd.f32 %v371, %v1703
    %v1705 = vpop.f32.mrf.mxu0
    %v1706 = vadd.f32 %v371, %v1705
    %1707 = vdwg.mxu0
    %1708 = vmatpush.bf16.msra.mxu0 %v1159
    %1709 = vmatpush.bf16.msra.mxu0 %v1155
    %1710 = vmatpush.bf16.msra.mxu0 %v1151
    %1711 = vmatpush.bf16.msra.mxu0 %v1147
    %1712 = vmatpush.bf16.msra.mxu0 %v1143
    %1713 = vmatpush.bf16.msra.mxu0 %v1139
    %1714 = vmatpush.bf16.msra.mxu0 %v1135
    %1715 = vmatpush.bf16.msra.mxu0 %v1131
    %1716 = vmatmul.bf16.gmra.mxu0 %v121
    %v1717 = vpop.f32.mrf.mxu0
    %v1718 = vadd.f32 %v1704, %v1717
    %v1719 = vpop.f32.mrf.mxu0
    %v1720 = vadd.f32 %v1706, %v1719
    %1721 = vdwg.mxu0
    %1722 = vmatpush.bf16.msra.mxu0 %v1191
    %1723 = vmatpush.bf16.msra.mxu0 %v1187
    %1724 = vmatpush.bf16.msra.mxu0 %v1183
    %1725 = vmatpush.bf16.msra.mxu0 %v1179
    %1726 = vmatpush.bf16.msra.mxu0 %v1175
    %1727 = vmatpush.bf16.msra.mxu0 %v1171
    %1728 = vmatpush.bf16.msra.mxu0 %v1167
    %1729 = vmatpush.bf16.msra.mxu0 %v1163
    %1730 = vmatmul.bf16.gmra.mxu0 %v122
    %v1731 = vpop.f32.mrf.mxu0
    %v1732 = vadd.f32 %v1718, %v1731
    %v1733 = vpop.f32.mrf.mxu0
    %v1734 = vadd.f32 %v1720, %v1733
    %1735 = vdwg.mxu0
    %1736 = vmatpush.bf16.msra.mxu0 %v1223
    %1737 = vmatpush.bf16.msra.mxu0 %v1219
    %1738 = vmatpush.bf16.msra.mxu0 %v1215
    %1739 = vmatpush.bf16.msra.mxu0 %v1211
    %1740 = vmatpush.bf16.msra.mxu0 %v1207
    %1741 = vmatpush.bf16.msra.mxu0 %v1203
    %1742 = vmatpush.bf16.msra.mxu0 %v1199
    %1743 = vmatpush.bf16.msra.mxu0 %v1195
    %1744 = vmatmul.bf16.gmra.mxu0 %v123
    %v1745 = vpop.f32.mrf.mxu0
    %v1746 = vadd.f32 %v1732, %v1745
    %v1747 = vpop.f32.mrf.mxu0
    %v1748 = vadd.f32 %v1734, %v1747
    %1749 = vdwg.mxu0
    %1750 = vmatpush.bf16.msra.mxu0 %v1255
    %1751 = vmatpush.bf16.msra.mxu0 %v1251
    %1752 = vmatpush.bf16.msra.mxu0 %v1247
    %1753 = vmatpush.bf16.msra.mxu0 %v1243
    %1754 = vmatpush.bf16.msra.mxu0 %v1239
    %1755 = vmatpush.bf16.msra.mxu0 %v1235
    %1756 = vmatpush.bf16.msra.mxu0 %v1231
    %1757 = vmatpush.bf16.msra.mxu0 %v1227
    %1758 = vmatmul.bf16.gmra.mxu0 %v124
    %v1759 = vpop.f32.mrf.mxu0
    %v1760 = vadd.f32 %v1746, %v1759
    %v1761 = vpop.f32.mrf.mxu0
    %v1762 = vadd.f32 %v1748, %v1761
    %1763 = vdwg.mxu0
    %1764 = vmatpush.bf16.msra.mxu0 %v1287
    %1765 = vmatpush.bf16.msra.mxu0 %v1283
    %1766 = vmatpush.bf16.msra.mxu0 %v1279
    %1767 = vmatpush.bf16.msra.mxu0 %v1275
    %1768 = vmatpush.bf16.msra.mxu0 %v1271
    %1769 = vmatpush.bf16.msra.mxu0 %v1267
    %1770 = vmatpush.bf16.msra.mxu0 %v1263
    %1771 = vmatpush.bf16.msra.mxu0 %v1259
    %1772 = vmatmul.bf16.gmra.mxu0 %v125
    %v1773 = vpop.f32.mrf.mxu0
    %v1774 = vadd.f32 %v1760, %v1773
    %v1775 = vpop.f32.mrf.mxu0
    %v1776 = vadd.f32 %v1762, %v1775
    %1777 = vdwg.mxu0
    %1778 = vmatpush.bf16.msra.mxu0 %v1319
    %1779 = vmatpush.bf16.msra.mxu0 %v1315
    %1780 = vmatpush.bf16.msra.mxu0 %v1311
    %1781 = vmatpush.bf16.msra.mxu0 %v1307
    %1782 = vmatpush.bf16.msra.mxu0 %v1303
    %1783 = vmatpush.bf16.msra.mxu0 %v1299
    %1784 = vmatpush.bf16.msra.mxu0 %v1295
    %1785 = vmatpush.bf16.msra.mxu0 %v1291
    %1786 = vmatmul.bf16.gmra.mxu0 %v126
    %v1787 = vpop.f32.mrf.mxu0
    %v1788 = vadd.f32 %v1774, %v1787
    %v1789 = vpop.f32.mrf.mxu0
    %v1790 = vadd.f32 %v1776, %v1789
    %1791 = vdwg.mxu0
    %1792 = vmatpush.bf16.msra.mxu0 0
    %1793 = vmatpush.bf16.msra.mxu0 0
    %1794 = vmatpush.bf16.msra.mxu0 0
    %1795 = vmatpush.bf16.msra.mxu0 0
    %1796 = vmatpush.bf16.msra.mxu0 %v1335
    %1797 = vmatpush.bf16.msra.mxu0 %v1331
    %1798 = vmatpush.bf16.msra.mxu0 %v1327
    %1799 = vmatpush.bf16.msra.mxu0 %v1323
    %1800 = vmatmul.bf16.gmra.mxu0 %v1580
    %v1801 = vpop.f32.mrf.mxu0
    %v1802 = vadd.f32 %v1788, %v1801
    %v1803 = vpop.f32.mrf.mxu0
    %v1804 = vadd.f32 %v1790, %v1803
    %1805 = vdwg.mxu0
    %1806 = vmatpush.bf16.msra.mxu0 %v1128
    %1807 = vmatpush.bf16.msra.mxu0 %v1124
    %1808 = vmatpush.bf16.msra.mxu0 %v1120
    %1809 = vmatpush.bf16.msra.mxu0 %v1116
    %1810 = vmatpush.bf16.msra.mxu0 %v1112
    %1811 = vmatpush.bf16.msra.mxu0 %v1108
    %1812 = vmatpush.bf16.msra.mxu0 %v1104
    %1813 = vmatpush.bf16.msra.mxu0 %v1100
    %1814 = vmatmul.bf16.gmra.mxu0 %v120
    %v1815 = vpop.f32.mrf.mxu0
    %v1816 = vadd.f32 %v372, %v1815
    %v1817 = vpop.f32.mrf.mxu0
    %v1818 = vadd.f32 %v372, %v1817
    %1819 = vdwg.mxu0
    %1820 = vmatpush.bf16.msra.mxu0 %v1160
    %1821 = vmatpush.bf16.msra.mxu0 %v1156
    %1822 = vmatpush.bf16.msra.mxu0 %v1152
    %1823 = vmatpush.bf16.msra.mxu0 %v1148
    %1824 = vmatpush.bf16.msra.mxu0 %v1144
    %1825 = vmatpush.bf16.msra.mxu0 %v1140
    %1826 = vmatpush.bf16.msra.mxu0 %v1136
    %1827 = vmatpush.bf16.msra.mxu0 %v1132
    %1828 = vmatmul.bf16.gmra.mxu0 %v121
    %v1829 = vpop.f32.mrf.mxu0
    %v1830 = vadd.f32 %v1816, %v1829
    %v1831 = vpop.f32.mrf.mxu0
    %v1832 = vadd.f32 %v1818, %v1831
    %1833 = vdwg.mxu0
    %1834 = vmatpush.bf16.msra.mxu0 %v1192
    %1835 = vmatpush.bf16.msra.mxu0 %v1188
    %1836 = vmatpush.bf16.msra.mxu0 %v1184
    %1837 = vmatpush.bf16.msra.mxu0 %v1180
    %1838 = vmatpush.bf16.msra.mxu0 %v1176
    %1839 = vmatpush.bf16.msra.mxu0 %v1172
    %1840 = vmatpush.bf16.msra.mxu0 %v1168
    %1841 = vmatpush.bf16.msra.mxu0 %v1164
    %1842 = vmatmul.bf16.gmra.mxu0 %v122
    %v1843 = vpop.f32.mrf.mxu0
    %v1844 = vadd.f32 %v1830, %v1843
    %v1845 = vpop.f32.mrf.mxu0
    %v1846 = vadd.f32 %v1832, %v1845
    %1847 = vdwg.mxu0
    %1848 = vmatpush.bf16.msra.mxu0 %v1224
    %1849 = vmatpush.bf16.msra.mxu0 %v1220
    %1850 = vmatpush.bf16.msra.mxu0 %v1216
    %1851 = vmatpush.bf16.msra.mxu0 %v1212
    %1852 = vmatpush.bf16.msra.mxu0 %v1208
    %1853 = vmatpush.bf16.msra.mxu0 %v1204
    %1854 = vmatpush.bf16.msra.mxu0 %v1200
    %1855 = vmatpush.bf16.msra.mxu0 %v1196
    %1856 = vmatmul.bf16.gmra.mxu0 %v123
    %v1857 = vpop.f32.mrf.mxu0
    %v1858 = vadd.f32 %v1844, %v1857
    %v1859 = vpop.f32.mrf.mxu0
    %v1860 = vadd.f32 %v1846, %v1859
    %1861 = vdwg.mxu0
    %1862 = vmatpush.bf16.msra.mxu0 %v1256
    %1863 = vmatpush.bf16.msra.mxu0 %v1252
    %1864 = vmatpush.bf16.msra.mxu0 %v1248
    %1865 = vmatpush.bf16.msra.mxu0 %v1244
    %1866 = vmatpush.bf16.msra.mxu0 %v1240
    %1867 = vmatpush.bf16.msra.mxu0 %v1236
    %1868 = vmatpush.bf16.msra.mxu0 %v1232
    %1869 = vmatpush.bf16.msra.mxu0 %v1228
    %1870 = vmatmul.bf16.gmra.mxu0 %v124
    %v1871 = vpop.f32.mrf.mxu0
    %v1872 = vadd.f32 %v1858, %v1871
    %v1873 = vpop.f32.mrf.mxu0
    %v1874 = vadd.f32 %v1860, %v1873
    %1875 = vdwg.mxu0
    %1876 = vmatpush.bf16.msra.mxu0 %v1288
    %1877 = vmatpush.bf16.msra.mxu0 %v1284
    %1878 = vmatpush.bf16.msra.mxu0 %v1280
    %1879 = vmatpush.bf16.msra.mxu0 %v1276
    %1880 = vmatpush.bf16.msra.mxu0 %v1272
    %1881 = vmatpush.bf16.msra.mxu0 %v1268
    %1882 = vmatpush.bf16.msra.mxu0 %v1264
    %1883 = vmatpush.bf16.msra.mxu0 %v1260
    %1884 = vmatmul.bf16.gmra.mxu0 %v125
    %v1885 = vpop.f32.mrf.mxu0
    %v1886 = vadd.f32 %v1872, %v1885
    %v1887 = vpop.f32.mrf.mxu0
    %v1888 = vadd.f32 %v1874, %v1887
    %1889 = vdwg.mxu0
    %1890 = vmatpush.bf16.msra.mxu0 %v1320
    %1891 = vmatpush.bf16.msra.mxu0 %v1316
    %1892 = vmatpush.bf16.msra.mxu0 %v1312
    %1893 = vmatpush.bf16.msra.mxu0 %v1308
    %1894 = vmatpush.bf16.msra.mxu0 %v1304
    %1895 = vmatpush.bf16.msra.mxu0 %v1300
    %1896 = vmatpush.bf16.msra.mxu0 %v1296
    %1897 = vmatpush.bf16.msra.mxu0 %v1292
    %1898 = vmatmul.bf16.gmra.mxu0 %v126
    %v1899 = vpop.f32.mrf.mxu0
    %v1900 = vadd.f32 %v1886, %v1899
    %v1901 = vpop.f32.mrf.mxu0
    %v1902 = vadd.f32 %v1888, %v1901
    %1903 = vdwg.mxu0
    %1904 = vmatpush.bf16.msra.mxu0 0
    %1905 = vmatpush.bf16.msra.mxu0 0
    %1906 = vmatpush.bf16.msra.mxu0 0
    %1907 = vmatpush.bf16.msra.mxu0 0
    %1908 = vmatpush.bf16.msra.mxu0 %v1336
    %1909 = vmatpush.bf16.msra.mxu0 %v1332
    %1910 = vmatpush.bf16.msra.mxu0 %v1328
    %1911 = vmatpush.bf16.msra.mxu0 %v1324
    %1912 = vmatmul.bf16.gmra.mxu0 %v1580
    %v1913 = vpop.f32.mrf.mxu0
    %v1914 = vadd.f32 %v1900, %v1913
    %v1915 = vpop.f32.mrf.mxu0
    %v1916 = vadd.f32 %v1902, %v1915
    %1917 = vdwg.mxu0
    %1918 = vmatpush.bf16.msra.mxu0 %v1129
    %1919 = vmatpush.bf16.msra.mxu0 %v1125
    %1920 = vmatpush.bf16.msra.mxu0 %v1121
    %1921 = vmatpush.bf16.msra.mxu0 %v1117
    %1922 = vmatpush.bf16.msra.mxu0 %v1113
    %1923 = vmatpush.bf16.msra.mxu0 %v1109
    %1924 = vmatpush.bf16.msra.mxu0 %v1105
    %1925 = vmatpush.bf16.msra.mxu0 %v1101
    %1926 = vmatmul.bf16.gmra.mxu0 %v120
    %v1927 = vpop.f32.mrf.mxu0
    %v1928 = vadd.f32 %v373, %v1927
    %v1929 = vpop.f32.mrf.mxu0
    %v1930 = vadd.f32 %v373, %v1929
    %1931 = vdwg.mxu0
    %1932 = vmatpush.bf16.msra.mxu0 %v1161
    %1933 = vmatpush.bf16.msra.mxu0 %v1157
    %1934 = vmatpush.bf16.msra.mxu0 %v1153
    %1935 = vmatpush.bf16.msra.mxu0 %v1149
    %1936 = vmatpush.bf16.msra.mxu0 %v1145
    %1937 = vmatpush.bf16.msra.mxu0 %v1141
    %1938 = vmatpush.bf16.msra.mxu0 %v1137
    %1939 = vmatpush.bf16.msra.mxu0 %v1133
    %1940 = vmatmul.bf16.gmra.mxu0 %v121
    %v1941 = vpop.f32.mrf.mxu0
    %v1942 = vadd.f32 %v1928, %v1941
    %v1943 = vpop.f32.mrf.mxu0
    %v1944 = vadd.f32 %v1930, %v1943
    %1945 = vdwg.mxu0
    %1946 = vmatpush.bf16.msra.mxu0 %v1193
    %1947 = vmatpush.bf16.msra.mxu0 %v1189
    %1948 = vmatpush.bf16.msra.mxu0 %v1185
    %1949 = vmatpush.bf16.msra.mxu0 %v1181
    %1950 = vmatpush.bf16.msra.mxu0 %v1177
    %1951 = vmatpush.bf16.msra.mxu0 %v1173
    %1952 = vmatpush.bf16.msra.mxu0 %v1169
    %1953 = vmatpush.bf16.msra.mxu0 %v1165
    %1954 = vmatmul.bf16.gmra.mxu0 %v122
    %v1955 = vpop.f32.mrf.mxu0
    %v1956 = vadd.f32 %v1942, %v1955
    %v1957 = vpop.f32.mrf.mxu0
    %v1958 = vadd.f32 %v1944, %v1957
    %1959 = vdwg.mxu0
    %1960 = vmatpush.bf16.msra.mxu0 %v1225
    %1961 = vmatpush.bf16.msra.mxu0 %v1221
    %1962 = vmatpush.bf16.msra.mxu0 %v1217
    %1963 = vmatpush.bf16.msra.mxu0 %v1213
    %1964 = vmatpush.bf16.msra.mxu0 %v1209
    %1965 = vmatpush.bf16.msra.mxu0 %v1205
    %1966 = vmatpush.bf16.msra.mxu0 %v1201
    %1967 = vmatpush.bf16.msra.mxu0 %v1197
    %1968 = vmatmul.bf16.gmra.mxu0 %v123
    %v1969 = vpop.f32.mrf.mxu0
    %v1970 = vadd.f32 %v1956, %v1969
    %v1971 = vpop.f32.mrf.mxu0
    %v1972 = vadd.f32 %v1958, %v1971
    %1973 = vdwg.mxu0
    %1974 = vmatpush.bf16.msra.mxu0 %v1257
    %1975 = vmatpush.bf16.msra.mxu0 %v1253
    %1976 = vmatpush.bf16.msra.mxu0 %v1249
    %1977 = vmatpush.bf16.msra.mxu0 %v1245
    %1978 = vmatpush.bf16.msra.mxu0 %v1241
    %1979 = vmatpush.bf16.msra.mxu0 %v1237
    %1980 = vmatpush.bf16.msra.mxu0 %v1233
    %1981 = vmatpush.bf16.msra.mxu0 %v1229
    %1982 = vmatmul.bf16.gmra.mxu0 %v124
    %v1983 = vpop.f32.mrf.mxu0
    %v1984 = vadd.f32 %v1970, %v1983
    %v1985 = vpop.f32.mrf.mxu0
    %v1986 = vadd.f32 %v1972, %v1985
    %1987 = vdwg.mxu0
    %1988 = vmatpush.bf16.msra.mxu0 %v1289
    %1989 = vmatpush.bf16.msra.mxu0 %v1285
    %1990 = vmatpush.bf16.msra.mxu0 %v1281
    %1991 = vmatpush.bf16.msra.mxu0 %v1277
    %1992 = vmatpush.bf16.msra.mxu0 %v1273
    %1993 = vmatpush.bf16.msra.mxu0 %v1269
    %1994 = vmatpush.bf16.msra.mxu0 %v1265
    %1995 = vmatpush.bf16.msra.mxu0 %v1261
    %1996 = vmatmul.bf16.gmra.mxu0 %v125
    %v1997 = vpop.f32.mrf.mxu0
    %v1998 = vadd.f32 %v1984, %v1997
    %v1999 = vpop.f32.mrf.mxu0
    %v2000 = vadd.f32 %v1986, %v1999
    %2001 = vdwg.mxu0
    %2002 = vmatpush.bf16.msra.mxu0 %v1321
    %2003 = vmatpush.bf16.msra.mxu0 %v1317
    %2004 = vmatpush.bf16.msra.mxu0 %v1313
    %2005 = vmatpush.bf16.msra.mxu0 %v1309
    %2006 = vmatpush.bf16.msra.mxu0 %v1305
    %2007 = vmatpush.bf16.msra.mxu0 %v1301
    %2008 = vmatpush.bf16.msra.mxu0 %v1297
    %2009 = vmatpush.bf16.msra.mxu0 %v1293
    %2010 = vmatmul.bf16.gmra.mxu0 %v126
    %v2011 = vpop.f32.mrf.mxu0
    %v2012 = vadd.f32 %v1998, %v2011
    %v2013 = vpop.f32.mrf.mxu0
    %v2014 = vadd.f32 %v2000, %v2013
    %2015 = vdwg.mxu0
    %2016 = vmatpush.bf16.msra.mxu0 0
    %2017 = vmatpush.bf16.msra.mxu0 0
    %2018 = vmatpush.bf16.msra.mxu0 0
    %2019 = vmatpush.bf16.msra.mxu0 0
    %2020 = vmatpush.bf16.msra.mxu0 %v1337
    %2021 = vmatpush.bf16.msra.mxu0 %v1333
    %2022 = vmatpush.bf16.msra.mxu0 %v1329
    %2023 = vmatpush.bf16.msra.mxu0 %v1325
    %2024 = vmatmul.bf16.gmra.mxu0 %v1580
    %v2025 = vpop.f32.mrf.mxu0
    %v2026 = vadd.f32 %v2012, %v2025
    %v2027 = vpop.f32.mrf.mxu0
    %v2028 = vadd.f32 %v2014, %v2027
    %2029 = vdwg.mxu0
    %v2030 = vmax.f32 %v1690, 0.0
    %v2031 = vmax.f32 %v1802, 0.0
    %v2032 = vmax.f32 %v1914, 0.0
    %v2033 = vmax.f32 %v2026, 0.0
    %v2034 = vmax.f32 %v1692, 0.0
    %v2035 = vmax.f32 %v1804, 0.0
    %v2036 = vmax.f32 %v1916, 0.0
    %v2037 = vmax.f32 %v2028, 0.0
    %v2038 = vpack.c.bf16 %v2034, %v2030
    %v2039 = vpack.c.bf16 %v2035, %v2031
    %v2040 = vpack.c.bf16 %v2036, %v2032
    %v2041 = vpack.c.bf16 %v2037, %v2033
    %v2042 = vld [vmem:[#allocation8] sm:$0xf]
    %v2043 = vld [vmem:[#allocation8 + $0x4] sm:$0xf]
    %v2044 = vld [vmem:[#allocation8 + $0x8] sm:$0xf]
    %v2045 = vld [vmem:[#allocation8 + $0xc] sm:$0xf]
    %v2046 = vld [vmem:[#allocation8 + $0x10] sm:$0xf]
    %v2047 = vld [vmem:[#allocation8 + $0x14] sm:$0xf]
    %v2048 = vld [vmem:[#allocation8 + $0x18] sm:$0xf]
    %v2049 = vld [vmem:[#allocation8 + $0x1c] sm:$0xf]
    %v2050 = vld [vmem:[#allocation8 + $0x20] sm:$0xf]
    %v2051 = vld [vmem:[#allocation8 + $0x24] sm:$0xf]
    %v2052 = vld [vmem:[#allocation8 + $0x28] sm:$0xf]
    %v2053 = vld [vmem:[#allocation8 + $0x2c] sm:$0xf]
    %v2054 = vld [vmem:[#allocation8 + $0x30] sm:$0xf]
    %v2055 = vld [vmem:[#allocation8 + $0x34] sm:$0xf]
    %v2056 = vld [vmem:[#allocation8 + $0x38] sm:$0xf]
    %v2057 = vld [vmem:[#allocation8 + $0x3c] sm:$0xf]
    %v2058 = vld [vmem:[#allocation8 + $0x40] sm:$0xf]
    %v2059 = vld [vmem:[#allocation8 + $0x44] sm:$0xf]
    %v2060 = vld [vmem:[#allocation8 + $0x48] sm:$0xf]
    %v2061 = vld [vmem:[#allocation8 + $0x4c] sm:$0xf]
    %v2062 = vld [vmem:[#allocation8 + $0x50] sm:$0xf]
    %v2063 = vld [vmem:[#allocation8 + $0x54] sm:$0xf]
    %v2064 = vld [vmem:[#allocation8 + $0x58] sm:$0xf]
    %v2065 = vld [vmem:[#allocation8 + $0x5c] sm:$0xf]
    %v2066 = vld [vmem:[#allocation8 + $0x60] sm:$0xf]
    %v2067 = vld [vmem:[#allocation8 + $0x64] sm:$0xf]
    %v2068 = vld [vmem:[#allocation8 + $0x68] sm:$0xf]
    %v2069 = vld [vmem:[#allocation8 + $0x6c] sm:$0xf]
    %v2070 = vld [vmem:[#allocation8 + $0x70] sm:$0xf]
    %v2071 = vld [vmem:[#allocation8 + $0x74] sm:$0xf]
    %v2072 = vld [vmem:[#allocation8 + $0x78] sm:$0xf]
    %v2073 = vld [vmem:[#allocation8 + $0x7c] sm:$0xf]
    %v2074 = vld [vmem:[#allocation8 + $0x80] sm:$0xf]
    %v2075 = vld [vmem:[#allocation8 + $0x84] sm:$0xf]
    %v2076 = vld [vmem:[#allocation8 + $0x88] sm:$0xf]
    %v2077 = vld [vmem:[#allocation8 + $0x8c] sm:$0xf]
    %v2078 = vld [vmem:[#allocation8 + $0x90] sm:$0xf]
    %v2079 = vld [vmem:[#allocation8 + $0x94] sm:$0xf]
    %v2080 = vld [vmem:[#allocation8 + $0x98] sm:$0xf]
    %v2081 = vld [vmem:[#allocation8 + $0x9c] sm:$0xf]
    %v2082 = vld [vmem:[#allocation8 + $0xa0] sm:$0xf]
    %v2083 = vld [vmem:[#allocation8 + $0xa4] sm:$0xf]
    %v2084 = vld [vmem:[#allocation8 + $0xa8] sm:$0xf]
    %v2085 = vld [vmem:[#allocation8 + $0xac] sm:$0xf]
    %v2086 = vld [vmem:[#allocation8 + $0xb0] sm:$0xf]
    %v2087 = vld [vmem:[#allocation8 + $0xb4] sm:$0xf]
    %v2088 = vld [vmem:[#allocation8 + $0xb8] sm:$0xf]
    %v2089 = vld [vmem:[#allocation8 + $0xbc] sm:$0xf]
    %v2090 = vld [vmem:[#allocation8 + $0xc0] sm:$0xf]
    %v2091 = vld [vmem:[#allocation8 + $0xc4] sm:$0xf]
    %v2092 = vld [vmem:[#allocation8 + $0xc8] sm:$0xf]
    %v2093 = vld [vmem:[#allocation8 + $0xcc] sm:$0xf]
    %v2094 = vld [vmem:[#allocation8 + $0xd0] sm:$0xf]
    %v2095 = vld [vmem:[#allocation8 + $0xd4] sm:$0xf]
    %v2096 = vld [vmem:[#allocation8 + $0xd8] sm:$0xf]
    %v2097 = vld [vmem:[#allocation8 + $0xdc] sm:$0xf]
    %v2098 = vld [vmem:[#allocation8 + $0xe0] sm:$0xf]
    %v2099 = vld [vmem:[#allocation8 + $0xe4] sm:$0xf]
    %v2100 = vld [vmem:[#allocation8 + $0xe8] sm:$0xf]
    %v2101 = vld [vmem:[#allocation8 + $0xec] sm:$0xf]
    %v2102 = vld [vmem:[#allocation8 + $0xf0] sm:$0xf]
    %v2103 = vld [vmem:[#allocation8 + $0xf4] sm:$0xf]
    %v2104 = vld [vmem:[#allocation8 + $0xf8] sm:$0xf]
    %v2105 = vld [vmem:[#allocation8 + $0xfc] sm:$0xf]
    %v2106 = vld [vmem:[%s4] sm:$0x1]
    %v2108 = vperm.slane %v2106, 0
    %v2174 = vunpack.c.l.b16 %v2042
    %v2175 = vunpack.c.l.b16 %v2043
    %v2176 = vunpack.c.l.b16 %v2044
    %v2177 = vunpack.c.l.b16 %v2045
    %v2178 = vunpack.c.l.b16 %v2046
    %v2179 = vunpack.c.l.b16 %v2047
    %v2180 = vunpack.c.l.b16 %v2048
    %v2181 = vunpack.c.l.b16 %v2049
    %v2182 = vunpack.c.l.b16 %v2050
    %v2183 = vunpack.c.l.b16 %v2051
    %v2184 = vunpack.c.l.b16 %v2052
    %v2185 = vunpack.c.l.b16 %v2053
    %v2186 = vunpack.c.l.b16 %v2054
    %v2187 = vunpack.c.l.b16 %v2055
    %v2188 = vunpack.c.l.b16 %v2056
    %v2189 = vunpack.c.l.b16 %v2057
    %v2190 = vunpack.c.l.b16 %v2058
    %v2191 = vunpack.c.l.b16 %v2059
    %v2192 = vunpack.c.l.b16 %v2060
    %v2193 = vunpack.c.l.b16 %v2061
    %v2194 = vunpack.c.l.b16 %v2062
    %v2195 = vunpack.c.l.b16 %v2063
    %v2196 = vunpack.c.l.b16 %v2064
    %v2197 = vunpack.c.l.b16 %v2065
    %v2198 = vunpack.c.l.b16 %v2066
    %v2199 = vunpack.c.l.b16 %v2067
    %v2200 = vunpack.c.l.b16 %v2068
    %v2201 = vunpack.c.l.b16 %v2069
    %v2202 = vunpack.c.l.b16 %v2070
    %v2203 = vunpack.c.l.b16 %v2071
    %v2204 = vunpack.c.l.b16 %v2072
    %v2205 = vunpack.c.l.b16 %v2073
    %v2206 = vunpack.c.l.b16 %v2074
    %v2207 = vunpack.c.l.b16 %v2075
    %v2208 = vunpack.c.l.b16 %v2076
    %v2209 = vunpack.c.l.b16 %v2077
    %v2210 = vunpack.c.l.b16 %v2078
    %v2211 = vunpack.c.l.b16 %v2079
    %v2212 = vunpack.c.l.b16 %v2080
    %v2213 = vunpack.c.l.b16 %v2081
    %v2214 = vunpack.c.l.b16 %v2082
    %v2215 = vunpack.c.l.b16 %v2083
    %v2216 = vunpack.c.l.b16 %v2084
    %v2217 = vunpack.c.l.b16 %v2085
    %v2218 = vunpack.c.l.b16 %v2086
    %v2219 = vunpack.c.l.b16 %v2087
    %v2220 = vunpack.c.l.b16 %v2088
    %v2221 = vunpack.c.l.b16 %v2089
    %v2222 = vunpack.c.l.b16 %v2090
    %v2223 = vunpack.c.l.b16 %v2091
    %v2224 = vunpack.c.l.b16 %v2092
    %v2225 = vunpack.c.l.b16 %v2093
    %v2226 = vunpack.c.l.b16 %v2094
    %v2227 = vunpack.c.l.b16 %v2095
    %v2228 = vunpack.c.l.b16 %v2096
    %v2229 = vunpack.c.l.b16 %v2097
    %v2230 = vunpack.c.l.b16 %v2098
    %v2231 = vunpack.c.l.b16 %v2099
    %v2232 = vunpack.c.l.b16 %v2100
    %v2233 = vunpack.c.l.b16 %v2101
    %v2234 = vunpack.c.l.b16 %v2102
    %v2235 = vunpack.c.l.b16 %v2103
    %v2236 = vunpack.c.l.b16 %v2104
    %v2237 = vunpack.c.l.b16 %v2105
    %v2238 = vpack.c.b16 %v2175, %v2174
    %v2239 = vpack.c.b16 %v2177, %v2176
    %v2240 = vpack.c.b16 %v2179, %v2178
    %v2241 = vpack.c.b16 %v2181, %v2180
    %v2242 = vpack.c.b16 %v2183, %v2182
    %v2243 = vpack.c.b16 %v2185, %v2184
    %v2244 = vpack.c.b16 %v2187, %v2186
    %v2245 = vpack.c.b16 %v2189, %v2188
    %v2246 = vpack.c.b16 %v2191, %v2190
    %v2247 = vpack.c.b16 %v2193, %v2192
    %v2248 = vpack.c.b16 %v2195, %v2194
    %v2249 = vpack.c.b16 %v2197, %v2196
    %v2250 = vpack.c.b16 %v2199, %v2198
    %v2251 = vpack.c.b16 %v2201, %v2200
    %v2252 = vpack.c.b16 %v2203, %v2202
    %v2253 = vpack.c.b16 %v2205, %v2204
    %v2254 = vpack.c.b16 %v2207, %v2206
    %v2255 = vpack.c.b16 %v2209, %v2208
    %v2256 = vpack.c.b16 %v2211, %v2210
    %v2257 = vpack.c.b16 %v2213, %v2212
    %v2258 = vpack.c.b16 %v2215, %v2214
    %v2259 = vpack.c.b16 %v2217, %v2216
    %v2260 = vpack.c.b16 %v2219, %v2218
    %v2261 = vpack.c.b16 %v2221, %v2220
    %v2262 = vpack.c.b16 %v2223, %v2222
    %v2263 = vpack.c.b16 %v2225, %v2224
    %v2264 = vpack.c.b16 %v2227, %v2226
    %v2265 = vpack.c.b16 %v2229, %v2228
    %v2266 = vpack.c.b16 %v2231, %v2230
    %v2267 = vpack.c.b16 %v2233, %v2232
    %v2268 = vpack.c.b16 %v2235, %v2234
    %v2269 = vpack.c.b16 %v2237, %v2236
    %2302 = vmatpush.bf16.msra.mxu0 %v2245
    %2303 = vmatpush.bf16.msra.mxu0 %v2244
    %2304 = vmatpush.bf16.msra.mxu0 %v2243
    %2305 = vmatpush.bf16.msra.mxu0 %v2242
    %2306 = vmatpush.bf16.msra.mxu0 %v2241
    %2307 = vmatpush.bf16.msra.mxu0 %v2240
    %2308 = vmatpush.bf16.msra.mxu0 %v2239
    %2309 = vmatpush.bf16.msra.mxu0 %v2238
    %2310 = vmatmul.bf16.gmra.mxu0 %v2038
    %v2311 = vpop.f32.mrf.mxu0
    %v2312 = vadd.f32 %v2108, %v2311
    %v2313 = vpop.f32.mrf.mxu0
    %v2314 = vadd.f32 %v2108, %v2313
    %2315 = vdwg.mxu0
    %2316 = vmatpush.bf16.msra.mxu0 %v2253
    %2317 = vmatpush.bf16.msra.mxu0 %v2252
    %2318 = vmatpush.bf16.msra.mxu0 %v2251
    %2319 = vmatpush.bf16.msra.mxu0 %v2250
    %2320 = vmatpush.bf16.msra.mxu0 %v2249
    %2321 = vmatpush.bf16.msra.mxu0 %v2248
    %2322 = vmatpush.bf16.msra.mxu0 %v2247
    %2323 = vmatpush.bf16.msra.mxu0 %v2246
    %2324 = vmatmul.bf16.gmra.mxu0 %v2039
    %v2325 = vpop.f32.mrf.mxu0
    %v2326 = vadd.f32 %v2312, %v2325
    %v2327 = vpop.f32.mrf.mxu0
    %v2328 = vadd.f32 %v2314, %v2327
    %2329 = vdwg.mxu0
    %2330 = vmatpush.bf16.msra.mxu0 %v2261
    %2331 = vmatpush.bf16.msra.mxu0 %v2260
    %2332 = vmatpush.bf16.msra.mxu0 %v2259
    %2333 = vmatpush.bf16.msra.mxu0 %v2258
    %2334 = vmatpush.bf16.msra.mxu0 %v2257
    %2335 = vmatpush.bf16.msra.mxu0 %v2256
    %2336 = vmatpush.bf16.msra.mxu0 %v2255
    %2337 = vmatpush.bf16.msra.mxu0 %v2254
    %2338 = vmatmul.bf16.gmra.mxu0 %v2040
    %v2339 = vpop.f32.mrf.mxu0
    %v2340 = vadd.f32 %v2326, %v2339
    %v2341 = vpop.f32.mrf.mxu0
    %v2342 = vadd.f32 %v2328, %v2341
    %2343 = vdwg.mxu0
    %2344 = vmatpush.bf16.msra.mxu0 %v2269
    %2345 = vmatpush.bf16.msra.mxu0 %v2268
    %2346 = vmatpush.bf16.msra.mxu0 %v2267
    %2347 = vmatpush.bf16.msra.mxu0 %v2266
    %2348 = vmatpush.bf16.msra.mxu0 %v2265
    %2349 = vmatpush.bf16.msra.mxu0 %v2264
    %2350 = vmatpush.bf16.msra.mxu0 %v2263
    %2351 = vmatpush.bf16.msra.mxu0 %v2262
    %2352 = vmatmul.bf16.gmra.mxu0 %v2041
    %v2353 = vpop.f32.mrf.mxu0
    %v2354 = vadd.f32 %v2340, %v2353
    %v2355 = vpop.f32.mrf.mxu0
    %v2356 = vadd.f32 %v2342, %v2355
    %2357 = vdwg.mxu0
    %v2358 = vmax.f32 %v2354, 0.0
    %v2359 = vmax.f32 %v2356, 0.0
    %v2360 = vpack.c.bf16 %v2359, %v2358
    %v2361 = vld [vmem:[#allocation10] sm:$0xf]
    %v2362 = vld [vmem:[#allocation10 + $0x4] sm:$0xf]
    %v2363 = vld [vmem:[#allocation10 + $0x8] sm:$0xf]
    %v2364 = vld [vmem:[#allocation10 + $0xc] sm:$0xf]
    %v2365 = vld [vmem:[#allocation10 + $0x10] sm:$0xf]
    %v2366 = vld [vmem:[#allocation10 + $0x14] sm:$0xf]
    %v2367 = vld [vmem:[#allocation10 + $0x18] sm:$0xf]
    %v2368 = vld [vmem:[#allocation10 + $0x1c] sm:$0xf]
    %v2369 = vld [vmem:[#allocation10 + $0x20] sm:$0xf]
    %v2370 = vld [vmem:[#allocation10 + $0x24] sm:$0xf]
    %v2371 = vld [vmem:[#allocation10 + $0x28] sm:$0xf]
    %v2372 = vld [vmem:[#allocation10 + $0x2c] sm:$0xf]
    %v2373 = vld [vmem:[#allocation10 + $0x30] sm:$0xf]
    %v2374 = vld [vmem:[#allocation10 + $0x34] sm:$0xf]
    %v2375 = vld [vmem:[#allocation10 + $0x38] sm:$0xf]
    %v2376 = vld [vmem:[#allocation10 + $0x3c] sm:$0xf]
    %v2377 = vld [vmem:[%s6] sm:$0x1]
    %v2379 = vperm.slane %v2377, 0
    %v2397 = vunpack.c.l.b16 %v2361
    %v2398 = vunpack.c.l.b16 %v2362
    %v2399 = vunpack.c.l.b16 %v2363
    %v2400 = vunpack.c.l.b16 %v2364
    %v2401 = vunpack.c.l.b16 %v2365
    %v2402 = vunpack.c.l.b16 %v2366
    %v2403 = vunpack.c.l.b16 %v2367
    %v2404 = vunpack.c.l.b16 %v2368
    %v2405 = vunpack.c.l.b16 %v2369
    %v2406 = vunpack.c.l.b16 %v2370
    %v2407 = vunpack.c.l.b16 %v2371
    %v2408 = vunpack.c.l.b16 %v2372
    %v2409 = vunpack.c.l.b16 %v2373
    %v2410 = vunpack.c.l.b16 %v2374
    %v2411 = vunpack.c.l.b16 %v2375
    %v2412 = vunpack.c.l.b16 %v2376
    %v2413 = vpack.c.b16 %v2398, %v2397
    %v2414 = vpack.c.b16 %v2400, %v2399
    %v2415 = vpack.c.b16 %v2402, %v2401
    %v2416 = vpack.c.b16 %v2404, %v2403
    %v2417 = vpack.c.b16 %v2406, %v2405
    %v2418 = vpack.c.b16 %v2408, %v2407
    %v2419 = vpack.c.b16 %v2410, %v2409
    %v2420 = vpack.c.b16 %v2412, %v2411
    %2429 = vmatpush.bf16.msra.mxu0 %v2420
    %2430 = vmatpush.bf16.msra.mxu0 %v2419
    %2431 = vmatpush.bf16.msra.mxu0 %v2418
    %2432 = vmatpush.bf16.msra.mxu0 %v2417
    %2433 = vmatpush.bf16.msra.mxu0 %v2416
    %2434 = vmatpush.bf16.msra.mxu0 %v2415
    %2435 = vmatpush.bf16.msra.mxu0 %v2414
    %2436 = vmatpush.bf16.msra.mxu0 %v2413
    %2437 = vmatmul.bf16.gmra.mxu0 %v2360
    %v2438 = vpop.f32.mrf.mxu0
    %v2439 = vadd.f32 %v2379, %v2438
    %v2440 = vpop.f32.mrf.mxu0
    %v2441 = vadd.f32 %v2379, %v2440
    %2442 = vdwg.mxu0
    %v2443 = vpack.c.bf16 %v2439, %v2439
    %v2444 = vpack.c.bf16 %v2441, %v2441
    %2445 = vst [vmem:[#allocation11] sm:$0xf] %v2443
    %2446 = vst [vmem:[#allocation11 + $0x4] sm:$0xf] %v2444
    // Predicated region
    $region50: #{tpu_custom_call.1} parent=1 // pred_check
      _
    $region51: #{tpu_custom_call.1} parent=1 // pred_check_branch
      %2448 = sbr.rel (0) target = $region53
    $region52: #{tpu_custom_call.1} parent=1 // pred_region
      %2450 = vsyncadd [#allocation4], 0
      %s2451 = sshll.u32 [#allocation11], 4
      %s2452 = int_to_ptr.vmem [resolvable:$true] %s2451
      %s2453 = sshll.u32 %s7, 4
      %s2454 = int_to_ptr.hbm [resolvable:$true] %s2453
      %2459 = dma.vmem_to_hbm [thread:$0]  %s2452, 128, %s2454, [#allocation4], 64, 64, 4
    $region53: #{tpu_custom_call.1} parent=1 // pred_fallthru
      _
    // Predicated region
    $region54: #{tpu_custom_call.1} parent=1 // pred_check
      _
    $region55: #{tpu_custom_call.1} parent=1 // pred_check_branch
      %2461 = sbr.rel (0) target = $region57
    $region56: #{tpu_custom_call.1} parent=1 // pred_region
      %2463 = dma.done [#allocation4], 128
    $region57: #{tpu_custom_call.1} parent=1 // pred_fallthru
      _
    %2464 = vsyncpa [#allocation3], 1
    %2465 = vsyncpa [#allocation6], 1
    %2466 = vsyncpa [#allocation9], 1
    %2467 = vsyncpa [#allocation4], 1

</llo_original>
